<compile_context>
chip_gen: v5e
topology: v5e:2x2
jax: 0.10.0
libtpu: 0.0.40
codegen_flags: <defaults>
</compile_context>

<pallas_src>
import functools
import numpy as np
import jax
import jax.numpy as jnp
from jax.experimental import pallas as pl
from jax.experimental.pallas import tpu as pltpu

_SQRT1_2 = np.float32(1.0 / np.sqrt(2.0))


def _gelu(x):
    # exact GELU (PyTorch nn.GELU default): 0.5 * x * (1 + erf(x / sqrt(2)))
    return 0.5 * x * (1.0 + jax.lax.erf(x * _SQRT1_2))


# ---------------------------------------------------------------------------
# Fused encoder kernel: one batch tile (B images) per grid step; all weights
# and every intermediate activation stay resident in VMEM.
#
# Activation layout: (spatial_row, B, width*channels) -- spatial rows on the
# leading (untiled) axis, the batch tile on the sublane axis, (w, c) on lanes.
# For a k=3 / stride=2 / pad=1 conv, output row i needs input rows 2i-1, 2i,
# 2i+1: three leading-axis slab views (odd rows shifted by a zero slab, even
# rows, odd rows).  Each view feeds ONE full-width MXU matmul against a
# per-ky weight matrix that folds the three horizontal taps, the stride-2
# column selection, the zero padding and the channel mixing.
# ---------------------------------------------------------------------------
def _encoder_kernel(x_ref, w1_ref, w2_ref, w3_ref, wl_ref,
                    b1_ref, b2_ref, b3_ref, bl_ref, o_ref):

    def conv_gelu(a, w_ref, b_ref):
        # a: (s_in, B, s_in * c_in) in the compute dtype.
        s_in, bsz, k = a.shape
        s_out = s_in // 2
        a4 = a.reshape(s_out, 2, bsz, k)        # split even/odd spatial rows
        even = a4[:, 0]                         # input rows 2i      (ky = 1)
        odd = a4[:, 1]                          # input rows 2i + 1  (ky = 2)
        odd_shift = jnp.concatenate(            # input rows 2i - 1  (ky = 0)
            [jnp.zeros((1, bsz, k), a.dtype), odd[:-1]], axis=0)

        def tap(view, ky):
            return jnp.dot(view.reshape(s_out * bsz, k), w_ref[ky],
                           preferred_element_type=jnp.float32)

        y = tap(odd_shift, 0) + tap(even, 1) + tap(odd, 2)       # (s_out*B, n)
        y = _gelu(y + b_ref[...])                                 # f32
        return y.astype(a.dtype).reshape(s_out, bsz, y.shape[-1])

    a1 = conv_gelu(x_ref[...], w1_ref, b1_ref)   # (16, B, 16*c_hid)
    a2 = conv_gelu(a1, w2_ref, b2_ref)           # (8,  B,  8*2*c_hid)
    a3 = conv_gelu(a2, w3_ref, b3_ref)           # (4,  B,  4*2*c_hid)

    # Flatten + Linear: the NCHW flatten permutation is folded into wl_ref,
    # so each of the 4 spatial rows feeds one (B, w*c) x (w*c, latent) dot.
    wl = wl_ref[...]
    acc = jnp.dot(a3[0], wl[0], preferred_element_type=jnp.float32)
    for h in range(1, a3.shape[0]):
        acc = acc + jnp.dot(a3[h], wl[h], preferred_element_type=jnp.float32)
    o_ref[...] = acc + bl_ref[...]               # dense (B, latent) store


# ---------------------------------------------------------------------------
# One-time parameter preparation (all layout folding happens here, once).
# ---------------------------------------------------------------------------
def prepare_encoder_params(params, num_input_channels, base_channel_size,
                           latent_dim, dtype=jnp.bfloat16):
    c_hid = base_channel_size
    c2 = 2 * c_hid

    def conv_view_weights(w, s_in):
        # w: (cout, cin, 3, 3) -> (3, s_in*cin, s_out*cout): one full-width
        # matrix per kernel row ky, folding the 3 horizontal taps, the
        # stride-2 column selection, zero padding and channel mixing.
        w = np.asarray(w, np.float32)
        cout, cin = w.shape[0], w.shape[1]
        s_out = s_in // 2
        mats = np.zeros((3, s_in * cin, s_out * cout), np.float32)
        for ky in range(3):
            for j in range(s_out):
                for kx in range(3):
                    wi = 2 * j + kx - 1          # input column for this tap
                    if 0 <= wi < s_in:
                        mats[ky, wi * cin:(wi + 1) * cin,
                             j * cout:(j + 1) * cout] = w[:, :, ky, kx].T
        return jnp.asarray(mats, dtype)

    def tile_bias(b, s_out):
        return jnp.asarray(
            np.tile(np.asarray(b, np.float32), s_out).reshape(1, -1),
            jnp.float32)

    # Fold the PyTorch NCHW flatten order (c, h, w) into the Linear weight:
    # (latent, c2*4*4) -> (h, w*c2, latent), matching the activation lanes.
    wl = np.asarray(params["w_lin"], np.float32).reshape(latent_dim, c2, 4, 4)
    wl = wl.transpose(2, 3, 1, 0).reshape(4, 4 * c2, latent_dim)

    return dict(
        w1=conv_view_weights(params["w1"], 32),
        w2=conv_view_weights(params["w2"], 16),
        w3=conv_view_weights(params["w3"], 8),
        wl=jnp.asarray(wl, dtype),
        b1=tile_bias(params["b1"], 16),
        b2=tile_bias(params["b2"], 8),
        b3=tile_bias(params["b3"], 4),
        bl=jnp.asarray(np.asarray(params["b_lin"], np.float32)
                       .reshape(1, latent_dim), jnp.float32),
    )


# ---------------------------------------------------------------------------
# Encoder forward: a single fused, batch-tiled pallas_call.
# ---------------------------------------------------------------------------
def encoder_forward(prep, x_nchw, block_batch=8):
    # block_batch: images per grid step (multiple of 8, the sublane tile);
    # raise to 16-64 on v6e/v7x to better fill the 256-wide MXU.
    assert block_batch % 8 == 0
    n, c, hh, ww = x_nchw.shape
    cdt = prep["w1"].dtype
    latent = prep["bl"].shape[-1]

    # (N, C, H, W) -> (H, N, W*C): spatial rows leading, batch on sublanes,
    # (w, c) on lanes.  Pure layout plumbing done once in XLA; the image data
    # is read exactly once by the kernel.
    x_prep = jnp.transpose(x_nchw, (2, 0, 3, 1)).reshape(hh, n, ww * c)
    x_prep = x_prep.astype(cdt)
    n_pad = ((n + block_batch - 1) // block_batch) * block_batch
    if n_pad != n:
        x_prep = jnp.pad(x_prep, ((0, 0), (0, n_pad - n), (0, 0)))

    def const_spec(arr):
        nd = arr.ndim
        return pl.BlockSpec(arr.shape, lambda i, _nd=nd: (0,) * _nd)

    weights = (prep["w1"], prep["w2"], prep["w3"], prep["wl"],
               prep["b1"], prep["b2"], prep["b3"], prep["bl"])

    out = pl.pallas_call(
        _encoder_kernel,
        out_shape=jax.ShapeDtypeStruct((n_pad, latent), jnp.float32),
        grid=(n_pad // block_batch,),
        in_specs=[pl.BlockSpec((hh, block_batch, ww * c), lambda i: (0, i, 0))]
                 + [const_spec(a) for a in weights],
        out_specs=pl.BlockSpec((block_batch, latent), lambda i: (i, 0)),
        compiler_params=pltpu.CompilerParams(
            dimension_semantics=("parallel",)),   # batch tiles across TCs (v7x)
    )(x_prep, *weights)
    return out[:n]


# ---------------------------------------------------------------------------
# Pure-JAX reference (correctness self-check)
# ---------------------------------------------------------------------------
def reference_forward(params, x_nchw):
    def conv(x, w, b):
        y = jax.lax.conv_general_dilated(
            x, w, window_strides=(2, 2), padding=((1, 1), (1, 1)),
            dimension_numbers=("NCHW", "OIHW", "NCHW"))
        y = y + b[None, :, None, None]
        return 0.5 * y * (1.0 + jax.lax.erf(y * _SQRT1_2))

    x = conv(x_nchw, params["w1"], params["b1"])
    x = conv(x, params["w2"], params["b2"])
    x = conv(x, params["w3"], params["b3"])
    x = x.reshape(x.shape[0], -1)
    return x @ params["w_lin"].T + params["b_lin"]


# ---------------------------------------------------------------------------
# Deterministic parameter init (PyTorch-like uniform(-1/sqrt(fan_in), +...))
# ---------------------------------------------------------------------------
def init_params(key, num_input_channels, base_channel_size, latent_dim):
    c_hid = base_channel_size
    keys = jax.random.split(key, 8)

    def conv_init(kw, kb, cout, cin):
        bound = 1.0 / np.sqrt(cin * 3 * 3)
        w = jax.random.uniform(kw, (cout, cin, 3, 3), jnp.float32, -bound, bound)
        b = jax.random.uniform(kb, (cout,), jnp.float32, -bound, bound)
        return w, b

    def lin_init(kw, kb, out_f, in_f):
        bound = 1.0 / np.sqrt(in_f)
        w = jax.random.uniform(kw, (out_f, in_f), jnp.float32, -bound, bound)
        b = jax.random.uniform(kb, (out_f,), jnp.float32, -bound, bound)
        return w, b

    w1, b1 = conv_init(keys[0], keys[1], c_hid, num_input_channels)
    w2, b2 = conv_init(keys[2], keys[3], 2 * c_hid, c_hid)
    w3, b3 = conv_init(keys[4], keys[5], 2 * c_hid, 2 * c_hid)
    w_lin, b_lin = lin_init(keys[6], keys[7], latent_dim, 2 * 16 * c_hid)
    return dict(w1=w1, b1=b1, w2=w2, b2=b2, w3=w3, b3=b3,
                w_lin=w_lin, b_lin=b_lin)


if __name__ == "__main__":
    # The module hard-codes Linear(2*16*c_hid, ...), which requires 32x32
    # input (three stride-2 convs: 32 -> 16 -> 8 -> 4, and 4*4*2*c_hid).
    batch, in_ch, spatial = 16, 3, 32
    base_channel_size, latent_dim = 4, 16
    block_batch = 8            # grid = (2,): even, so both v7x TCs get work

    root = jax.random.PRNGKey(0)
    k_params, k_x = jax.random.split(root)
    params = init_params(k_params, in_ch, base_channel_size, latent_dim)
    x = jax.random.normal(k_x, (batch, in_ch, spatial, spatial), jnp.float32)

    z_ref = jax.block_until_ready(reference_forward(params, x))
    fwd = jax.jit(functools.partial(encoder_forward, block_batch=block_batch))

    # Exact f32-matmul path.
    prep32 = prepare_encoder_params(params, in_ch, base_channel_size,
                                    latent_dim, dtype=jnp.float32)
    z32 = jax.block_until_ready(fwd(prep32, x))
    assert z32.shape == (batch, latent_dim), z32.shape
    np.testing.assert_allclose(np.asarray(z32), np.asarray(z_ref),
                               rtol=1e-4, atol=1e-4)

    # Default bf16-operand path (v6e/v7x MXU fast path); the looser tolerance
    # is the expected precision change called out in the review.
    prep16 = prepare_encoder_params(params, in_ch, base_channel_size,
                                    latent_dim, dtype=jnp.bfloat16)
    z16 = jax.block_until_ready(fwd(prep16, x))
    assert z16.shape == (batch, latent_dim), z16.shape
    np.testing.assert_allclose(np.asarray(z16), np.asarray(z_ref),
                               rtol=2e-2, atol=2e-2)

    print("KERNEL_OK")
</pallas_src>

<mosaic_0001>
module attributes {stable_mosaic.version = 11 : i64} {
  func.func @_encoder_kernel(%arg0: i32, %arg1: memref<32x8x96xf32, #tpu.memory_space<vmem>>, %arg2: memref<3x96x64xf32, #tpu.memory_space<vmem>>, %arg3: memref<3x64x64xf32, #tpu.memory_space<vmem>>, %arg4: memref<3x64x32xf32, #tpu.memory_space<vmem>>, %arg5: memref<4x32x16xf32, #tpu.memory_space<vmem>>, %arg6: memref<1x64xf32, #tpu.memory_space<vmem>>, %arg7: memref<1x64xf32, #tpu.memory_space<vmem>>, %arg8: memref<1x32xf32, #tpu.memory_space<vmem>>, %arg9: memref<1x16xf32, #tpu.memory_space<vmem>>, %arg10: memref<8x16xf32, #tpu.memory_space<vmem>>) attributes {dimension_semantics = [#tpu.dimension_semantics<parallel>], iteration_bounds = array<i64: 2>, scalar_prefetch = 0 : i64, scratch_operands = 0 : i64, tpu.core_type = #tpu.core_type<tc>, window_params = [{transform_indices = @transform_0, window_bounds = array<i64: 32, 8, 96>}, {pipeline_mode = #tpu.pipeline_mode<synchronous>, transform_indices = @transform_1, window_bounds = array<i64: 3, 96, 64>}, {pipeline_mode = #tpu.pipeline_mode<synchronous>, transform_indices = @transform_2, window_bounds = array<i64: 3, 64, 64>}, {pipeline_mode = #tpu.pipeline_mode<synchronous>, transform_indices = @transform_3, window_bounds = array<i64: 3, 64, 32>}, {pipeline_mode = #tpu.pipeline_mode<synchronous>, transform_indices = @transform_4, window_bounds = array<i64: 4, 32, 16>}, {pipeline_mode = #tpu.pipeline_mode<synchronous>, transform_indices = @transform_5, window_bounds = array<i64: 1, 64>}, {pipeline_mode = #tpu.pipeline_mode<synchronous>, transform_indices = @transform_6, window_bounds = array<i64: 1, 64>}, {pipeline_mode = #tpu.pipeline_mode<synchronous>, transform_indices = @transform_7, window_bounds = array<i64: 1, 32>}, {pipeline_mode = #tpu.pipeline_mode<synchronous>, transform_indices = @transform_8, window_bounds = array<i64: 1, 16>}, {transform_indices = @transform_9, window_bounds = array<i64: 8, 16>}]} {
    %c0 = arith.constant 0 : index
    %c0_0 = arith.constant 0 : index
    %c0_1 = arith.constant 0 : index
    %0 = vector.load %arg1[%c0, %c0_0, %c0_1] : memref<32x8x96xf32, #tpu.memory_space<vmem>>, vector<32x8x96xf32>
    %1 = vector.shape_cast %0 : vector<32x8x96xf32> to vector<16x2x8x96xf32>
    %2 = vector.extract_strided_slice %1 {offsets = [0, 0, 0, 0], sizes = [16, 1, 8, 96], strides = [1, 1, 1, 1]} : vector<16x2x8x96xf32> to vector<16x1x8x96xf32>
    %3 = vector.shape_cast %2 : vector<16x1x8x96xf32> to vector<16x8x96xf32>
    %4 = vector.extract_strided_slice %1 {offsets = [0, 1, 0, 0], sizes = [16, 1, 8, 96], strides = [1, 1, 1, 1]} : vector<16x2x8x96xf32> to vector<16x1x8x96xf32>
    %5 = vector.shape_cast %4 : vector<16x1x8x96xf32> to vector<16x8x96xf32>
    %cst = arith.constant 0.000000e+00 : f32
    %6 = vector.broadcast %cst : f32 to vector<1x8x96xf32>
    %7 = vector.extract_strided_slice %5 {offsets = [0, 0, 0], sizes = [15, 8, 96], strides = [1, 1, 1]} : vector<16x8x96xf32> to vector<15x8x96xf32>
    %8 = tpu.concatenate %6, %7 in 0 : vector<1x8x96xf32>, vector<15x8x96xf32> -> vector<16x8x96xf32>
    %9 = vector.shape_cast %8 : vector<16x8x96xf32> to vector<128x96xf32>
    %c0_2 = arith.constant 0 : index
    %c0_3 = arith.constant 0 : index
    %c0_4 = arith.constant 0 : index
    %10 = vector.load %arg2[%c0_2, %c0_3, %c0_4] : memref<3x96x64xf32, #tpu.memory_space<vmem>>, vector<1x96x64xf32>
    %11 = vector.shape_cast %10 : vector<1x96x64xf32> to vector<96x64xf32>
    %cst_5 = arith.constant dense<0.000000e+00> : vector<128x64xf32>
    %12 = tpu.matmul %9, %11, %cst_5 {dimension_numbers = #tpu.dot_dimension_numbers<[1], [0], [0], [1], [0, 0, 1, 1], [], []>} : vector<128x96xf32>, vector<96x64xf32>, vector<128x64xf32> -> vector<128x64xf32>
    %13 = vector.shape_cast %3 : vector<16x8x96xf32> to vector<128x96xf32>
    %c1 = arith.constant 1 : index
    %c0_6 = arith.constant 0 : index
    %c0_7 = arith.constant 0 : index
    %14 = vector.load %arg2[%c1, %c0_6, %c0_7] : memref<3x96x64xf32, #tpu.memory_space<vmem>>, vector<1x96x64xf32>
    %15 = vector.shape_cast %14 : vector<1x96x64xf32> to vector<96x64xf32>
    %cst_8 = arith.constant dense<0.000000e+00> : vector<128x64xf32>
    %16 = tpu.matmul %13, %15, %cst_8 {dimension_numbers = #tpu.dot_dimension_numbers<[1], [0], [0], [1], [0, 0, 1, 1], [], []>} : vector<128x96xf32>, vector<96x64xf32>, vector<128x64xf32> -> vector<128x64xf32>
    %17 = arith.addf %12, %16 : vector<128x64xf32>
    %18 = vector.shape_cast %5 : vector<16x8x96xf32> to vector<128x96xf32>
    %c2 = arith.constant 2 : index
    %c0_9 = arith.constant 0 : index
    %c0_10 = arith.constant 0 : index
    %19 = vector.load %arg2[%c2, %c0_9, %c0_10] : memref<3x96x64xf32, #tpu.memory_space<vmem>>, vector<1x96x64xf32>
    %20 = vector.shape_cast %19 : vector<1x96x64xf32> to vector<96x64xf32>
    %cst_11 = arith.constant dense<0.000000e+00> : vector<128x64xf32>
    %21 = tpu.matmul %18, %20, %cst_11 {dimension_numbers = #tpu.dot_dimension_numbers<[1], [0], [0], [1], [0, 0, 1, 1], [], []>} : vector<128x96xf32>, vector<96x64xf32>, vector<128x64xf32> -> vector<128x64xf32>
    %22 = arith.addf %17, %21 : vector<128x64xf32>
    %c0_12 = arith.constant 0 : index
    %c0_13 = arith.constant 0 : index
    %23 = vector.load %arg6[%c0_12, %c0_13] : memref<1x64xf32, #tpu.memory_space<vmem>>, vector<1x64xf32>
    %24 = vector.broadcast %23 : vector<1x64xf32> to vector<128x64xf32>
    %25 = arith.addf %22, %24 : vector<128x64xf32>
    %cst_14 = arith.constant 5.000000e-01 : f32
    %26 = vector.broadcast %cst_14 : f32 to vector<128x64xf32>
    %27 = arith.mulf %26, %25 : vector<128x64xf32>
    %cst_15 = arith.constant 0.707106769 : f32
    %28 = vector.broadcast %cst_15 : f32 to vector<128x64xf32>
    %29 = arith.mulf %25, %28 : vector<128x64xf32>
    %30 = math.erf %29 : vector<128x64xf32>
    %cst_16 = arith.constant 1.000000e+00 : f32
    %31 = vector.broadcast %cst_16 : f32 to vector<128x64xf32>
    %32 = arith.addf %31, %30 : vector<128x64xf32>
    %33 = arith.mulf %27, %32 : vector<128x64xf32>
    %34 = vector.shape_cast %33 : vector<128x64xf32> to vector<16x8x64xf32>
    %35 = vector.shape_cast %34 : vector<16x8x64xf32> to vector<8x2x8x64xf32>
    %36 = vector.extract_strided_slice %35 {offsets = [0, 0, 0, 0], sizes = [8, 1, 8, 64], strides = [1, 1, 1, 1]} : vector<8x2x8x64xf32> to vector<8x1x8x64xf32>
    %37 = vector.shape_cast %36 : vector<8x1x8x64xf32> to vector<8x8x64xf32>
    %38 = vector.extract_strided_slice %35 {offsets = [0, 1, 0, 0], sizes = [8, 1, 8, 64], strides = [1, 1, 1, 1]} : vector<8x2x8x64xf32> to vector<8x1x8x64xf32>
    %39 = vector.shape_cast %38 : vector<8x1x8x64xf32> to vector<8x8x64xf32>
    %cst_17 = arith.constant 0.000000e+00 : f32
    %40 = vector.broadcast %cst_17 : f32 to vector<1x8x64xf32>
    %41 = vector.extract_strided_slice %39 {offsets = [0, 0, 0], sizes = [7, 8, 64], strides = [1, 1, 1]} : vector<8x8x64xf32> to vector<7x8x64xf32>
    %42 = tpu.concatenate %40, %41 in 0 : vector<1x8x64xf32>, vector<7x8x64xf32> -> vector<8x8x64xf32>
    %43 = vector.shape_cast %42 : vector<8x8x64xf32> to vector<64x64xf32>
    %c0_18 = arith.constant 0 : index
    %c0_19 = arith.constant 0 : index
    %c0_20 = arith.constant 0 : index
    %44 = vector.load %arg3[%c0_18, %c0_19, %c0_20] : memref<3x64x64xf32, #tpu.memory_space<vmem>>, vector<1x64x64xf32>
    %45 = vector.shape_cast %44 : vector<1x64x64xf32> to vector<64x64xf32>
    %cst_21 = arith.constant dense<0.000000e+00> : vector<64x64xf32>
    %46 = tpu.matmul %43, %45, %cst_21 {dimension_numbers = #tpu.dot_dimension_numbers<[1], [0], [0], [1], [0, 0, 1, 1], [], []>} : vector<64x64xf32>, vector<64x64xf32>, vector<64x64xf32> -> vector<64x64xf32>
    %47 = vector.shape_cast %37 : vector<8x8x64xf32> to vector<64x64xf32>
    %c1_22 = arith.constant 1 : index
    %c0_23 = arith.constant 0 : index
    %c0_24 = arith.constant 0 : index
    %48 = vector.load %arg3[%c1_22, %c0_23, %c0_24] : memref<3x64x64xf32, #tpu.memory_space<vmem>>, vector<1x64x64xf32>
    %49 = vector.shape_cast %48 : vector<1x64x64xf32> to vector<64x64xf32>
    %cst_25 = arith.constant dense<0.000000e+00> : vector<64x64xf32>
    %50 = tpu.matmul %47, %49, %cst_25 {dimension_numbers = #tpu.dot_dimension_numbers<[1], [0], [0], [1], [0, 0, 1, 1], [], []>} : vector<64x64xf32>, vector<64x64xf32>, vector<64x64xf32> -> vector<64x64xf32>
    %51 = arith.addf %46, %50 : vector<64x64xf32>
    %52 = vector.shape_cast %39 : vector<8x8x64xf32> to vector<64x64xf32>
    %c2_26 = arith.constant 2 : index
    %c0_27 = arith.constant 0 : index
    %c0_28 = arith.constant 0 : index
    %53 = vector.load %arg3[%c2_26, %c0_27, %c0_28] : memref<3x64x64xf32, #tpu.memory_space<vmem>>, vector<1x64x64xf32>
    %54 = vector.shape_cast %53 : vector<1x64x64xf32> to vector<64x64xf32>
    %cst_29 = arith.constant dense<0.000000e+00> : vector<64x64xf32>
    %55 = tpu.matmul %52, %54, %cst_29 {dimension_numbers = #tpu.dot_dimension_numbers<[1], [0], [0], [1], [0, 0, 1, 1], [], []>} : vector<64x64xf32>, vector<64x64xf32>, vector<64x64xf32> -> vector<64x64xf32>
    %56 = arith.addf %51, %55 : vector<64x64xf32>
    %c0_30 = arith.constant 0 : index
    %c0_31 = arith.constant 0 : index
    %57 = vector.load %arg7[%c0_30, %c0_31] : memref<1x64xf32, #tpu.memory_space<vmem>>, vector<1x64xf32>
    %58 = vector.broadcast %57 : vector<1x64xf32> to vector<64x64xf32>
    %59 = arith.addf %56, %58 : vector<64x64xf32>
    %cst_32 = arith.constant 5.000000e-01 : f32
    %60 = vector.broadcast %cst_32 : f32 to vector<64x64xf32>
    %61 = arith.mulf %60, %59 : vector<64x64xf32>
    %cst_33 = arith.constant 0.707106769 : f32
    %62 = vector.broadcast %cst_33 : f32 to vector<64x64xf32>
    %63 = arith.mulf %59, %62 : vector<64x64xf32>
    %64 = math.erf %63 : vector<64x64xf32>
    %cst_34 = arith.constant 1.000000e+00 : f32
    %65 = vector.broadcast %cst_34 : f32 to vector<64x64xf32>
    %66 = arith.addf %65, %64 : vector<64x64xf32>
    %67 = arith.mulf %61, %66 : vector<64x64xf32>
    %68 = vector.shape_cast %67 : vector<64x64xf32> to vector<8x8x64xf32>
    %69 = vector.shape_cast %68 : vector<8x8x64xf32> to vector<4x2x8x64xf32>
    %70 = vector.extract_strided_slice %69 {offsets = [0, 0, 0, 0], sizes = [4, 1, 8, 64], strides = [1, 1, 1, 1]} : vector<4x2x8x64xf32> to vector<4x1x8x64xf32>
    %71 = vector.shape_cast %70 : vector<4x1x8x64xf32> to vector<4x8x64xf32>
    %72 = vector.extract_strided_slice %69 {offsets = [0, 1, 0, 0], sizes = [4, 1, 8, 64], strides = [1, 1, 1, 1]} : vector<4x2x8x64xf32> to vector<4x1x8x64xf32>
    %73 = vector.shape_cast %72 : vector<4x1x8x64xf32> to vector<4x8x64xf32>
    %cst_35 = arith.constant 0.000000e+00 : f32
    %74 = vector.broadcast %cst_35 : f32 to vector<1x8x64xf32>
    %75 = vector.extract_strided_slice %73 {offsets = [0, 0, 0], sizes = [3, 8, 64], strides = [1, 1, 1]} : vector<4x8x64xf32> to vector<3x8x64xf32>
    %76 = tpu.concatenate %74, %75 in 0 : vector<1x8x64xf32>, vector<3x8x64xf32> -> vector<4x8x64xf32>
    %77 = vector.shape_cast %76 : vector<4x8x64xf32> to vector<32x64xf32>
    %c0_36 = arith.constant 0 : index
    %c0_37 = arith.constant 0 : index
    %c0_38 = arith.constant 0 : index
    %78 = vector.load %arg4[%c0_36, %c0_37, %c0_38] : memref<3x64x32xf32, #tpu.memory_space<vmem>>, vector<1x64x32xf32>
    %79 = vector.shape_cast %78 : vector<1x64x32xf32> to vector<64x32xf32>
    %cst_39 = arith.constant dense<0.000000e+00> : vector<32x32xf32>
    %80 = tpu.matmul %77, %79, %cst_39 {dimension_numbers = #tpu.dot_dimension_numbers<[1], [0], [0], [1], [0, 0, 1, 1], [], []>} : vector<32x64xf32>, vector<64x32xf32>, vector<32x32xf32> -> vector<32x32xf32>
    %81 = vector.shape_cast %71 : vector<4x8x64xf32> to vector<32x64xf32>
    %c1_40 = arith.constant 1 : index
    %c0_41 = arith.constant 0 : index
    %c0_42 = arith.constant 0 : index
    %82 = vector.load %arg4[%c1_40, %c0_41, %c0_42] : memref<3x64x32xf32, #tpu.memory_space<vmem>>, vector<1x64x32xf32>
    %83 = vector.shape_cast %82 : vector<1x64x32xf32> to vector<64x32xf32>
    %cst_43 = arith.constant dense<0.000000e+00> : vector<32x32xf32>
    %84 = tpu.matmul %81, %83, %cst_43 {dimension_numbers = #tpu.dot_dimension_numbers<[1], [0], [0], [1], [0, 0, 1, 1], [], []>} : vector<32x64xf32>, vector<64x32xf32>, vector<32x32xf32> -> vector<32x32xf32>
    %85 = arith.addf %80, %84 : vector<32x32xf32>
    %86 = vector.shape_cast %73 : vector<4x8x64xf32> to vector<32x64xf32>
    %c2_44 = arith.constant 2 : index
    %c0_45 = arith.constant 0 : index
    %c0_46 = arith.constant 0 : index
    %87 = vector.load %arg4[%c2_44, %c0_45, %c0_46] : memref<3x64x32xf32, #tpu.memory_space<vmem>>, vector<1x64x32xf32>
    %88 = vector.shape_cast %87 : vector<1x64x32xf32> to vector<64x32xf32>
    %cst_47 = arith.constant dense<0.000000e+00> : vector<32x32xf32>
    %89 = tpu.matmul %86, %88, %cst_47 {dimension_numbers = #tpu.dot_dimension_numbers<[1], [0], [0], [1], [0, 0, 1, 1], [], []>} : vector<32x64xf32>, vector<64x32xf32>, vector<32x32xf32> -> vector<32x32xf32>
    %90 = arith.addf %85, %89 : vector<32x32xf32>
    %c0_48 = arith.constant 0 : index
    %c0_49 = arith.constant 0 : index
    %91 = vector.load %arg8[%c0_48, %c0_49] : memref<1x32xf32, #tpu.memory_space<vmem>>, vector<1x32xf32>
    %92 = vector.broadcast %91 : vector<1x32xf32> to vector<32x32xf32>
    %93 = arith.addf %90, %92 : vector<32x32xf32>
    %cst_50 = arith.constant 5.000000e-01 : f32
    %94 = vector.broadcast %cst_50 : f32 to vector<32x32xf32>
    %95 = arith.mulf %94, %93 : vector<32x32xf32>
    %cst_51 = arith.constant 0.707106769 : f32
    %96 = vector.broadcast %cst_51 : f32 to vector<32x32xf32>
    %97 = arith.mulf %93, %96 : vector<32x32xf32>
    %98 = math.erf %97 : vector<32x32xf32>
    %cst_52 = arith.constant 1.000000e+00 : f32
    %99 = vector.broadcast %cst_52 : f32 to vector<32x32xf32>
    %100 = arith.addf %99, %98 : vector<32x32xf32>
    %101 = arith.mulf %95, %100 : vector<32x32xf32>
    %102 = vector.shape_cast %101 : vector<32x32xf32> to vector<4x8x32xf32>
    %c0_53 = arith.constant 0 : index
    %c0_54 = arith.constant 0 : index
    %c0_55 = arith.constant 0 : index
    %103 = vector.load %arg5[%c0_53, %c0_54, %c0_55] : memref<4x32x16xf32, #tpu.memory_space<vmem>>, vector<4x32x16xf32>
    %104 = vector.extract_strided_slice %102 {offsets = [0, 0, 0], sizes = [1, 8, 32], strides = [1, 1, 1]} : vector<4x8x32xf32> to vector<1x8x32xf32>
    %105 = vector.shape_cast %104 : vector<1x8x32xf32> to vector<8x32xf32>
    %106 = vector.extract_strided_slice %103 {offsets = [0, 0, 0], sizes = [1, 32, 16], strides = [1, 1, 1]} : vector<4x32x16xf32> to vector<1x32x16xf32>
    %107 = vector.shape_cast %106 : vector<1x32x16xf32> to vector<32x16xf32>
    %cst_56 = arith.constant dense<0.000000e+00> : vector<8x16xf32>
    %108 = tpu.matmul %105, %107, %cst_56 {dimension_numbers = #tpu.dot_dimension_numbers<[1], [0], [0], [1], [0, 0, 1, 1], [], []>} : vector<8x32xf32>, vector<32x16xf32>, vector<8x16xf32> -> vector<8x16xf32>
    %109 = vector.extract_strided_slice %102 {offsets = [1, 0, 0], sizes = [1, 8, 32], strides = [1, 1, 1]} : vector<4x8x32xf32> to vector<1x8x32xf32>
    %110 = vector.shape_cast %109 : vector<1x8x32xf32> to vector<8x32xf32>
    %111 = vector.extract_strided_slice %103 {offsets = [1, 0, 0], sizes = [1, 32, 16], strides = [1, 1, 1]} : vector<4x32x16xf32> to vector<1x32x16xf32>
    %112 = vector.shape_cast %111 : vector<1x32x16xf32> to vector<32x16xf32>
    %cst_57 = arith.constant dense<0.000000e+00> : vector<8x16xf32>
    %113 = tpu.matmul %110, %112, %cst_57 {dimension_numbers = #tpu.dot_dimension_numbers<[1], [0], [0], [1], [0, 0, 1, 1], [], []>} : vector<8x32xf32>, vector<32x16xf32>, vector<8x16xf32> -> vector<8x16xf32>
    %114 = arith.addf %108, %113 : vector<8x16xf32>
    %115 = vector.extract_strided_slice %102 {offsets = [2, 0, 0], sizes = [1, 8, 32], strides = [1, 1, 1]} : vector<4x8x32xf32> to vector<1x8x32xf32>
    %116 = vector.shape_cast %115 : vector<1x8x32xf32> to vector<8x32xf32>
    %117 = vector.extract_strided_slice %103 {offsets = [2, 0, 0], sizes = [1, 32, 16], strides = [1, 1, 1]} : vector<4x32x16xf32> to vector<1x32x16xf32>
    %118 = vector.shape_cast %117 : vector<1x32x16xf32> to vector<32x16xf32>
    %cst_58 = arith.constant dense<0.000000e+00> : vector<8x16xf32>
    %119 = tpu.matmul %116, %118, %cst_58 {dimension_numbers = #tpu.dot_dimension_numbers<[1], [0], [0], [1], [0, 0, 1, 1], [], []>} : vector<8x32xf32>, vector<32x16xf32>, vector<8x16xf32> -> vector<8x16xf32>
    %120 = arith.addf %114, %119 : vector<8x16xf32>
    %121 = vector.extract_strided_slice %102 {offsets = [3, 0, 0], sizes = [1, 8, 32], strides = [1, 1, 1]} : vector<4x8x32xf32> to vector<1x8x32xf32>
    %122 = vector.shape_cast %121 : vector<1x8x32xf32> to vector<8x32xf32>
    %123 = vector.extract_strided_slice %103 {offsets = [3, 0, 0], sizes = [1, 32, 16], strides = [1, 1, 1]} : vector<4x32x16xf32> to vector<1x32x16xf32>
    %124 = vector.shape_cast %123 : vector<1x32x16xf32> to vector<32x16xf32>
    %cst_59 = arith.constant dense<0.000000e+00> : vector<8x16xf32>
    %125 = tpu.matmul %122, %124, %cst_59 {dimension_numbers = #tpu.dot_dimension_numbers<[1], [0], [0], [1], [0, 0, 1, 1], [], []>} : vector<8x32xf32>, vector<32x16xf32>, vector<8x16xf32> -> vector<8x16xf32>
    %126 = arith.addf %120, %125 : vector<8x16xf32>
    %c0_60 = arith.constant 0 : index
    %c0_61 = arith.constant 0 : index
    %127 = vector.load %arg9[%c0_60, %c0_61] : memref<1x16xf32, #tpu.memory_space<vmem>>, vector<1x16xf32>
    %128 = vector.broadcast %127 : vector<1x16xf32> to vector<8x16xf32>
    %129 = arith.addf %126, %128 : vector<8x16xf32>
    %c0_62 = arith.constant 0 : index
    %c0_63 = arith.constant 0 : index
    %130 = vector.load %arg10[%c0_62, %c0_63] : memref<8x16xf32, #tpu.memory_space<vmem>>, vector<8x16xf32>
    tpu.vector_store %arg10[%c0_62, %c0_63], %129 {strides = array<i32>} : memref<8x16xf32, #tpu.memory_space<vmem>>, vector<8x16xf32>,
    return
  }
  func.func @transform_0(%arg0: i32) -> (i32, i32, i32) {
    %c0_i32 = arith.constant 0 : i32
    %c0_i32_0 = arith.constant 0 : i32
    %c0_i32_1 = arith.constant 0 : i32
    return %c0_i32, %arg0, %c0_i32_0 : i32, i32, i32
  }
  func.func @transform_1(%arg0: i32) -> (i32, i32, i32) {
    %c0_i32 = arith.constant 0 : i32
    %c0_i32_0 = arith.constant 0 : i32
    %c0_i32_1 = arith.constant 0 : i32
    %c0_i32_2 = arith.constant 0 : i32
    return %c0_i32, %c0_i32_0, %c0_i32_1 : i32, i32, i32
  }
  func.func @transform_2(%arg0: i32) -> (i32, i32, i32) {
    %c0_i32 = arith.constant 0 : i32
    %c0_i32_0 = arith.constant 0 : i32
    %c0_i32_1 = arith.constant 0 : i32
    %c0_i32_2 = arith.constant 0 : i32
    return %c0_i32, %c0_i32_0, %c0_i32_1 : i32, i32, i32
  }
  func.func @transform_3(%arg0: i32) -> (i32, i32, i32) {
    %c0_i32 = arith.constant 0 : i32
    %c0_i32_0 = arith.constant 0 : i32
    %c0_i32_1 = arith.constant 0 : i32
    %c0_i32_2 = arith.constant 0 : i32
    return %c0_i32, %c0_i32_0, %c0_i32_1 : i32, i32, i32
  }
  func.func @transform_4(%arg0: i32) -> (i32, i32, i32) {
    %c0_i32 = arith.constant 0 : i32
    %c0_i32_0 = arith.constant 0 : i32
    %c0_i32_1 = arith.constant 0 : i32
    %c0_i32_2 = arith.constant 0 : i32
    return %c0_i32, %c0_i32_0, %c0_i32_1 : i32, i32, i32
  }
  func.func @transform_5(%arg0: i32) -> (i32, i32) {
    %c0_i32 = arith.constant 0 : i32
    %c0_i32_0 = arith.constant 0 : i32
    %c0_i32_1 = arith.constant 0 : i32
    return %c0_i32, %c0_i32_0 : i32, i32
  }
  func.func @transform_6(%arg0: i32) -> (i32, i32) {
    %c0_i32 = arith.constant 0 : i32
    %c0_i32_0 = arith.constant 0 : i32
    %c0_i32_1 = arith.constant 0 : i32
    return %c0_i32, %c0_i32_0 : i32, i32
  }
  func.func @transform_7(%arg0: i32) -> (i32, i32) {
    %c0_i32 = arith.constant 0 : i32
    %c0_i32_0 = arith.constant 0 : i32
    %c0_i32_1 = arith.constant 0 : i32
    return %c0_i32, %c0_i32_0 : i32, i32
  }
  func.func @transform_8(%arg0: i32) -> (i32, i32) {
    %c0_i32 = arith.constant 0 : i32
    %c0_i32_0 = arith.constant 0 : i32
    %c0_i32_1 = arith.constant 0 : i32
    return %c0_i32, %c0_i32_0 : i32, i32
  }
  func.func @transform_9(%arg0: i32) -> (i32, i32) {
    %c0_i32 = arith.constant 0 : i32
    %c0_i32_0 = arith.constant 0 : i32
    return %arg0, %c0_i32 : i32, i32
  }
}

</mosaic_0001>

<llo_original>
// kernel: encoder_forward.1
$region0: #{encoder_forward.1}
  #allocation0 [shape = 'u32[]', space=smem, size = 0x4, offset = 0x4, fixed_abs, tag = 'smem constant byte address 0x4 - core index']
  #allocation1 [shape = 'u32[72,128]{1,0:T(1,128)}', space=vmem, size = 0x9000, scoped, tag = 'internal scratch']
  %s0 = inlined_call_operand.vmem [shape: f32[32,16,96], index: 0, kind: input, shape index: {}]
  %s1 = inlined_call_operand.vmem [shape: f32[3,96,64], index: 1, kind: input, shape index: {}]
  %s2 = inlined_call_operand.vmem [shape: f32[3,64,64], index: 2, kind: input, shape index: {}]
  %s3 = inlined_call_operand.vmem [shape: f32[3,64,32], index: 3, kind: input, shape index: {}]
  %s4 = inlined_call_operand.vmem [shape: f32[4,32,16], index: 4, kind: input, shape index: {}]
  %s5 = inlined_call_operand.vmem [shape: f32[1,64], index: 5, kind: input, shape index: {}]
  %s6 = inlined_call_operand.vmem [shape: f32[1,64], index: 6, kind: input, shape index: {}]
  %s7 = inlined_call_operand.vmem [shape: f32[1,32], index: 7, kind: input, shape index: {}]
  %s8 = inlined_call_operand.vmem [shape: f32[1,16], index: 8, kind: input, shape index: {}]
  %s9 = inlined_call_operand.hbm [shape: f32[16,16], index: 9, kind: output, shape index: {}]
  %s10 = sld [smem:[#allocation0]]
  $region107: #{encoder_forward.1} parent=0
    _
  %s12 = ssub.s32 1, %s10
  %s13 = scalar_select 0, %s12, %s10
  $region1: #{encoder_forward.1} parent=0
    #allocation2 [shape = 'u8[262144]{0}', space=vmem, size = 0x40000, scoped, tag = 'input window, operand 0']
    #allocation3 [shape = 'u8[8192]{0}', space=vmem, size = 0x2000, scoped, tag = 'output window, operand 0']
    #allocation4 [shape = 's32[2]{0}', space=sflag, size = 0x8, scoped, tag = 'scoped memory for encoder_forward.1']
    %14 = vsyncpa [#allocation4], 0
    %s15 = scalar_lea.sflag [#allocation4], 1
    %16 = vsyncpa %s15, 0
    loop: start=0, step=1, limit=4
    $region2: #{encoder_forward.1} parent=1 // loop_pre_header
      _
    $region3: #{encoder_forward.1} parent=1 // loop_header
      %s18 = sphi 0, %s22
      %p19 = scmp.ge.s32.totalorder %s18, 4
      %s28 = sphi 0, %s30
      %s31 = sphi 0, %s28
      %s32 = sphi 0, %s31
      %s48 = sphi 0, %s32
      %s52 = sphi 0, %s52
      %s54 = sphi 0, %s52
      %s55 = sphi 0, %s54
      %s69 = sphi 0, %s55
      %s73 = sphi 0, %s73
      %s75 = sphi 0, %s73
      %s76 = sphi 0, %s75
      %s90 = sphi 0, %s76
      %s94 = sphi 0, %s94
      %s96 = sphi 0, %s94
      %s97 = sphi 0, %s96
      %s111 = sphi 0, %s97
      %s115 = sphi 0, %s115
      %s117 = sphi 0, %s115
      %s118 = sphi 0, %s117
      %s132 = sphi 0, %s118
      %s136 = sphi 0, %s136
      %s138 = sphi 0, %s136
      %s139 = sphi 0, %s138
      %s153 = sphi 0, %s139
      %s157 = sphi 0, %s157
      %s159 = sphi 0, %s157
      %s160 = sphi 0, %s159
      %s174 = sphi 0, %s160
      %s178 = sphi 0, %s178
      %s180 = sphi 0, %s178
      %s181 = sphi 0, %s180
      %s195 = sphi 0, %s181
      %s199 = sphi 0, %s199
      %s201 = sphi 0, %s199
      %s202 = sphi 0, %s201
      %s216 = sphi 0, %s202
      %s222 = sphi 0, %s224
      %s225 = sphi 0, %s222
      %s226 = sphi 0, %s225
      %s242 = sphi 0, %s226
    $region4: #{encoder_forward.1} parent=1 // loop_header_branch
      %21 = sbr.rel (%p19) target = $region8
    $region5: #{encoder_forward.1} parent=1 // loop_body
      %s23 = ssub.s32 %s18, 1
      %s24 = ssub.s32 %s18, 2
      %s25 = sadd.s32 %s18, 1
      %s26 = ssub.s32 %s18, %s25
      %p27 = scmp.eq.s32.totalorder %s26, 0
      %s29 = sadd.s32 %s28, 1
      %s30 = scalar_select %p27, %s28, %s29
      %p33 = pneg %p27
      %p34 = scmp.eq.s32.totalorder %s18, 1
      %p35 = por %p33, %p34
      %p36 = scmp.ne.s32.totalorder %s28, %s31
      %p37 = scmp.eq.s32.totalorder %s18, 0
      %p38 = por %p36, %p37
      %p39 = scmp.ne.s32.totalorder %s28, %s31
      %p40 = scmp.eq.s32.totalorder %s23, 1
      %p41 = por %p39, %p40
      %p42 = scmp.ne.s32.totalorder %s31, %s32
      %p43 = scmp.eq.s32.totalorder %s23, 0
      %p44 = por %p42, %p43
      %p45 = scmp.ne.s32.totalorder %s31, %s32
      %p46 = scmp.eq.s32.totalorder %s24, 1
      %p47 = por %p45, %p46
      %p49 = scmp.ne.s32.totalorder %s32, %s48
      %p50 = scmp.eq.s32.totalorder %s24, 0
      %p51 = por %p49, %p50
      %s53 = sadd.s32 %s52, 1
      %p56 = scmp.eq.s32.totalorder %s18, 1
      %p57 = scmp.ne.s32.totalorder %s52, %s54
      %p58 = scmp.eq.s32.totalorder %s18, 0
      %p59 = por %p57, %p58
      %p60 = scmp.ne.s32.totalorder %s52, %s54
      %p61 = scmp.eq.s32.totalorder %s23, 1
      %p62 = por %p60, %p61
      %p63 = scmp.ne.s32.totalorder %s54, %s55
      %p64 = scmp.eq.s32.totalorder %s23, 0
      %p65 = por %p63, %p64
      %p66 = scmp.ne.s32.totalorder %s54, %s55
      %p67 = scmp.eq.s32.totalorder %s24, 1
      %p68 = por %p66, %p67
      %p70 = scmp.ne.s32.totalorder %s55, %s69
      %p71 = scmp.eq.s32.totalorder %s24, 0
      %p72 = por %p70, %p71
      %s74 = sadd.s32 %s73, 1
      %p77 = scmp.eq.s32.totalorder %s18, 1
      %p78 = scmp.ne.s32.totalorder %s73, %s75
      %p79 = scmp.eq.s32.totalorder %s18, 0
      %p80 = por %p78, %p79
      %p81 = scmp.ne.s32.totalorder %s73, %s75
      %p82 = scmp.eq.s32.totalorder %s23, 1
      %p83 = por %p81, %p82
      %p84 = scmp.ne.s32.totalorder %s75, %s76
      %p85 = scmp.eq.s32.totalorder %s23, 0
      %p86 = por %p84, %p85
      %p87 = scmp.ne.s32.totalorder %s75, %s76
      %p88 = scmp.eq.s32.totalorder %s24, 1
      %p89 = por %p87, %p88
      %p91 = scmp.ne.s32.totalorder %s76, %s90
      %p92 = scmp.eq.s32.totalorder %s24, 0
      %p93 = por %p91, %p92
      %s95 = sadd.s32 %s94, 1
      %p98 = scmp.eq.s32.totalorder %s18, 1
      %p99 = scmp.ne.s32.totalorder %s94, %s96
      %p100 = scmp.eq.s32.totalorder %s18, 0
      %p101 = por %p99, %p100
      %p102 = scmp.ne.s32.totalorder %s94, %s96
      %p103 = scmp.eq.s32.totalorder %s23, 1
      %p104 = por %p102, %p103
      %p105 = scmp.ne.s32.totalorder %s96, %s97
      %p106 = scmp.eq.s32.totalorder %s23, 0
      %p107 = por %p105, %p106
      %p108 = scmp.ne.s32.totalorder %s96, %s97
      %p109 = scmp.eq.s32.totalorder %s24, 1
      %p110 = por %p108, %p109
      %p112 = scmp.ne.s32.totalorder %s97, %s111
      %p113 = scmp.eq.s32.totalorder %s24, 0
      %p114 = por %p112, %p113
      %s116 = sadd.s32 %s115, 1
      %p119 = scmp.eq.s32.totalorder %s18, 1
      %p120 = scmp.ne.s32.totalorder %s115, %s117
      %p121 = scmp.eq.s32.totalorder %s18, 0
      %p122 = por %p120, %p121
      %p123 = scmp.ne.s32.totalorder %s115, %s117
      %p124 = scmp.eq.s32.totalorder %s23, 1
      %p125 = por %p123, %p124
      %p126 = scmp.ne.s32.totalorder %s117, %s118
      %p127 = scmp.eq.s32.totalorder %s23, 0
      %p128 = por %p126, %p127
      %p129 = scmp.ne.s32.totalorder %s117, %s118
      %p130 = scmp.eq.s32.totalorder %s24, 1
      %p131 = por %p129, %p130
      %p133 = scmp.ne.s32.totalorder %s118, %s132
      %p134 = scmp.eq.s32.totalorder %s24, 0
      %p135 = por %p133, %p134
      %s137 = sadd.s32 %s136, 1
      %p140 = scmp.eq.s32.totalorder %s18, 1
      %p141 = scmp.ne.s32.totalorder %s136, %s138
      %p142 = scmp.eq.s32.totalorder %s18, 0
      %p143 = por %p141, %p142
      %p144 = scmp.ne.s32.totalorder %s136, %s138
      %p145 = scmp.eq.s32.totalorder %s23, 1
      %p146 = por %p144, %p145
      %p147 = scmp.ne.s32.totalorder %s138, %s139
      %p148 = scmp.eq.s32.totalorder %s23, 0
      %p149 = por %p147, %p148
      %p150 = scmp.ne.s32.totalorder %s138, %s139
      %p151 = scmp.eq.s32.totalorder %s24, 1
      %p152 = por %p150, %p151
      %p154 = scmp.ne.s32.totalorder %s139, %s153
      %p155 = scmp.eq.s32.totalorder %s24, 0
      %p156 = por %p154, %p155
      %s158 = sadd.s32 %s157, 1
      %p161 = scmp.eq.s32.totalorder %s18, 1
      %p162 = scmp.ne.s32.totalorder %s157, %s159
      %p163 = scmp.eq.s32.totalorder %s18, 0
      %p164 = por %p162, %p163
      %p165 = scmp.ne.s32.totalorder %s157, %s159
      %p166 = scmp.eq.s32.totalorder %s23, 1
      %p167 = por %p165, %p166
      %p168 = scmp.ne.s32.totalorder %s159, %s160
      %p169 = scmp.eq.s32.totalorder %s23, 0
      %p170 = por %p168, %p169
      %p171 = scmp.ne.s32.totalorder %s159, %s160
      %p172 = scmp.eq.s32.totalorder %s24, 1
      %p173 = por %p171, %p172
      %p175 = scmp.ne.s32.totalorder %s160, %s174
      %p176 = scmp.eq.s32.totalorder %s24, 0
      %p177 = por %p175, %p176
      %s179 = sadd.s32 %s178, 1
      %p182 = scmp.eq.s32.totalorder %s18, 1
      %p183 = scmp.ne.s32.totalorder %s178, %s180
      %p184 = scmp.eq.s32.totalorder %s18, 0
      %p185 = por %p183, %p184
      %p186 = scmp.ne.s32.totalorder %s178, %s180
      %p187 = scmp.eq.s32.totalorder %s23, 1
      %p188 = por %p186, %p187
      %p189 = scmp.ne.s32.totalorder %s180, %s181
      %p190 = scmp.eq.s32.totalorder %s23, 0
      %p191 = por %p189, %p190
      %p192 = scmp.ne.s32.totalorder %s180, %s181
      %p193 = scmp.eq.s32.totalorder %s24, 1
      %p194 = por %p192, %p193
      %p196 = scmp.ne.s32.totalorder %s181, %s195
      %p197 = scmp.eq.s32.totalorder %s24, 0
      %p198 = por %p196, %p197
      %s200 = sadd.s32 %s199, 1
      %p203 = scmp.eq.s32.totalorder %s18, 1
      %p204 = scmp.ne.s32.totalorder %s199, %s201
      %p205 = scmp.eq.s32.totalorder %s18, 0
      %p206 = por %p204, %p205
      %p207 = scmp.ne.s32.totalorder %s199, %s201
      %p208 = scmp.eq.s32.totalorder %s23, 1
      %p209 = por %p207, %p208
      %p210 = scmp.ne.s32.totalorder %s201, %s202
      %p211 = scmp.eq.s32.totalorder %s23, 0
      %p212 = por %p210, %p211
      %p213 = scmp.ne.s32.totalorder %s201, %s202
      %p214 = scmp.eq.s32.totalorder %s24, 1
      %p215 = por %p213, %p214
      %p217 = scmp.ne.s32.totalorder %s202, %s216
      %p218 = scmp.eq.s32.totalorder %s24, 0
      %p219 = por %p217, %p218
      %s220 = ssub.s32 %s18, %s25
      %p221 = scmp.eq.s32.totalorder %s220, 0
      %s223 = sadd.s32 %s222, 1
      %s224 = scalar_select %p221, %s222, %s223
      %p227 = pneg %p221
      %p228 = scmp.eq.s32.totalorder %s18, 1
      %p229 = por %p227, %p228
      %p230 = scmp.ne.s32.totalorder %s222, %s225
      %p231 = scmp.eq.s32.totalorder %s18, 0
      %p232 = por %p230, %p231
      %p233 = scmp.ne.s32.totalorder %s222, %s225
      %p234 = scmp.eq.s32.totalorder %s23, 1
      %p235 = por %p233, %p234
      %p236 = scmp.ne.s32.totalorder %s225, %s226
      %p237 = scmp.eq.s32.totalorder %s23, 0
      %p238 = por %p236, %p237
      %p239 = scmp.ne.s32.totalorder %s225, %s226
      %p240 = scmp.eq.s32.totalorder %s24, 1
      %p241 = por %p239, %p240
      %p243 = scmp.ne.s32.totalorder %s226, %s242
      %p244 = scmp.eq.s32.totalorder %s24, 0
      %p245 = por %p243, %p244
      %p246 = scmp.le.s32.totalorder 1, %s18
      %p247 = scmp.lt.s32.totalorder %s18, 3
      %p248 = pnand %p246, %p247
      %p249 = pneg %p248
      // Predicated region
      $region9: #{encoder_forward.1} parent=5 // pred_check
        _
      $region10: #{encoder_forward.1} parent=5 // pred_check_branch
        %251 = sbr.rel (%p248) target = $region12
      $region11: #{encoder_forward.1} parent=5 // pred_region
        %s252 = ssub.s32 %s18, 1
        // Predicated region
        $region13: #{encoder_forward.1} parent=11 // pred_check
          %p253 = pneg %p65
        $region14: #{encoder_forward.1} parent=11 // pred_check_branch
          %255 = sbr.rel (%p253) target = $region16
        $region15: #{encoder_forward.1} parent=11 // pred_region
          _
        $region16: #{encoder_forward.1} parent=11 // pred_fallthru
          _
        // Predicated region
        $region17: #{encoder_forward.1} parent=11 // pred_check
          %p256 = pneg %p86
        $region18: #{encoder_forward.1} parent=11 // pred_check_branch
          %258 = sbr.rel (%p256) target = $region20
        $region19: #{encoder_forward.1} parent=11 // pred_region
          _
        $region20: #{encoder_forward.1} parent=11 // pred_fallthru
          _
        // Predicated region
        $region21: #{encoder_forward.1} parent=11 // pred_check
          %p259 = pneg %p107
        $region22: #{encoder_forward.1} parent=11 // pred_check_branch
          %261 = sbr.rel (%p259) target = $region24
        $region23: #{encoder_forward.1} parent=11 // pred_region
          _
        $region24: #{encoder_forward.1} parent=11 // pred_fallthru
          _
        // Predicated region
        $region25: #{encoder_forward.1} parent=11 // pred_check
          %p262 = pneg %p128
        $region26: #{encoder_forward.1} parent=11 // pred_check_branch
          %264 = sbr.rel (%p262) target = $region28
        $region27: #{encoder_forward.1} parent=11 // pred_region
          _
        $region28: #{encoder_forward.1} parent=11 // pred_fallthru
          _
        // Predicated region
        $region29: #{encoder_forward.1} parent=11 // pred_check
          %p265 = pneg %p149
        $region30: #{encoder_forward.1} parent=11 // pred_check_branch
          %267 = sbr.rel (%p265) target = $region32
        $region31: #{encoder_forward.1} parent=11 // pred_region
          _
        $region32: #{encoder_forward.1} parent=11 // pred_fallthru
          _
        // Predicated region
        $region33: #{encoder_forward.1} parent=11 // pred_check
          %p268 = pneg %p170
        $region34: #{encoder_forward.1} parent=11 // pred_check_branch
          %270 = sbr.rel (%p268) target = $region36
        $region35: #{encoder_forward.1} parent=11 // pred_region
          _
        $region36: #{encoder_forward.1} parent=11 // pred_fallthru
          _
        // Predicated region
        $region37: #{encoder_forward.1} parent=11 // pred_check
          %p271 = pneg %p191
        $region38: #{encoder_forward.1} parent=11 // pred_check_branch
          %273 = sbr.rel (%p271) target = $region40
        $region39: #{encoder_forward.1} parent=11 // pred_region
          _
        $region40: #{encoder_forward.1} parent=11 // pred_fallthru
          _
        // Predicated region
        $region41: #{encoder_forward.1} parent=11 // pred_check
          %p274 = pneg %p212
        $region42: #{encoder_forward.1} parent=11 // pred_check_branch
          %276 = sbr.rel (%p274) target = $region44
        $region43: #{encoder_forward.1} parent=11 // pred_region
          _
        $region44: #{encoder_forward.1} parent=11 // pred_fallthru
          _
      $region12: #{encoder_forward.1} parent=5 // pred_fallthru
        _
      %p277 = scmp.lt.s32.totalorder %s18, 2
      // Predicated region
      $region45: #{encoder_forward.1} parent=5 // pred_check
        %p278 = pneg %p277
      $region46: #{encoder_forward.1} parent=5 // pred_check_branch
        %280 = sbr.rel (%p278) target = $region48
      $region47: #{encoder_forward.1} parent=5 // pred_region
        // Predicated region
        $region49: #{encoder_forward.1} parent=47 // pred_check
          %p281 = pneg %p38
        $region50: #{encoder_forward.1} parent=47 // pred_check_branch
          %283 = sbr.rel (%p281) target = $region52
        $region51: #{encoder_forward.1} parent=47 // pred_region
          %s284 = sand.u32 %s28, 1
          %s285 = sand.u32 %s28, 1
          %s286 = smul.addr %s285, 256
          %s287 = scalar_lea.vmem [#allocation2], %s286
          %s288 = smul.addr %s18, 8
          %s289 = scalar_lea.vmem %s0, %s288
          // Predicated region
          $region53: #{encoder_forward.1} parent=51 // pred_check
            _
          $region54: #{encoder_forward.1} parent=51 // pred_check_branch
            %291 = sbr.rel (0) target = $region56
          $region55: #{encoder_forward.1} parent=51 // pred_region
            // Predicated region
            $region57: #{encoder_forward.1} parent=55 // pred_check
              _
            $region58: #{encoder_forward.1} parent=55 // pred_check_branch
              %293 = sbr.rel (0) target = $region60
            $region59: #{encoder_forward.1} parent=55 // pred_region
              // Predicated region
              $region72: #{encoder_forward.1} parent=59 // pred_check
                _
              $region73: #{encoder_forward.1} parent=59 // pred_check_branch
                %371 = sbr.rel (0) target = $region75
              $region74: #{encoder_forward.1} parent=59 // pred_region
                loop: start=0, step=1, limit=1
                $region76: #{encoder_forward.1} parent=74 // loop_pre_header
                  _
                $region77: #{encoder_forward.1} parent=74 // loop_header
                  %s373 = sphi 0, %s377
                  %p374 = scmp.ge.s32.totalorder %s373, 1
                  %s378 = sphi %s289, %s289
                  %s379 = sphi %s287, %s287
                $region78: #{encoder_forward.1} parent=74 // loop_header_branch
                  %376 = sbr.rel (%p374) target = $region82
                $region79: #{encoder_forward.1} parent=74 // loop_body
                  %v380 = vld [vmem:[%s378] sm:$0xff]
                  %381 = vst [vmem:[%s379] sm:$0xff] %v380
                  %v382 = vld [vmem:[%s378 + $0x10] sm:$0xff]
                  %383 = vst [vmem:[%s379 + $0x8] sm:$0xff] %v382
                  %v384 = vld [vmem:[%s378 + $0x20] sm:$0xff]
                  %385 = vst [vmem:[%s379 + $0x10] sm:$0xff] %v384
                  %v386 = vld [vmem:[%s378 + $0x30] sm:$0xff]
                  %387 = vst [vmem:[%s379 + $0x18] sm:$0xff] %v386
                  %v388 = vld [vmem:[%s378 + $0x40] sm:$0xff]
                  %389 = vst [vmem:[%s379 + $0x20] sm:$0xff] %v388
                  %v390 = vld [vmem:[%s378 + $0x50] sm:$0xff]
                  %391 = vst [vmem:[%s379 + $0x28] sm:$0xff] %v390
                  %v392 = vld [vmem:[%s378 + $0x60] sm:$0xff]
                  %393 = vst [vmem:[%s379 + $0x30] sm:$0xff] %v392
                  %v394 = vld [vmem:[%s378 + $0x70] sm:$0xff]
                  %395 = vst [vmem:[%s379 + $0x38] sm:$0xff] %v394
                  %v396 = vld [vmem:[%s378 + $0x80] sm:$0xff]
                  %397 = vst [vmem:[%s379 + $0x40] sm:$0xff] %v396
                  %v398 = vld [vmem:[%s378 + $0x90] sm:$0xff]
                  %399 = vst [vmem:[%s379 + $0x48] sm:$0xff] %v398
                  %v400 = vld [vmem:[%s378 + $0xa0] sm:$0xff]
                  %401 = vst [vmem:[%s379 + $0x50] sm:$0xff] %v400
                  %v402 = vld [vmem:[%s378 + $0xb0] sm:$0xff]
                  %403 = vst [vmem:[%s379 + $0x58] sm:$0xff] %v402
                  %v404 = vld [vmem:[%s378 + $0xc0] sm:$0xff]
                  %405 = vst [vmem:[%s379 + $0x60] sm:$0xff] %v404
                  %v406 = vld [vmem:[%s378 + $0xd0] sm:$0xff]
                  %407 = vst [vmem:[%s379 + $0x68] sm:$0xff] %v406
                  %v408 = vld [vmem:[%s378 + $0xe0] sm:$0xff]
                  %409 = vst [vmem:[%s379 + $0x70] sm:$0xff] %v408
                  %v410 = vld [vmem:[%s378 + $0xf0] sm:$0xff]
                  %411 = vst [vmem:[%s379 + $0x78] sm:$0xff] %v410
                  %v412 = vld [vmem:[%s378 + $0x100] sm:$0xff]
                  %413 = vst [vmem:[%s379 + $0x80] sm:$0xff] %v412
                  %v414 = vld [vmem:[%s378 + $0x110] sm:$0xff]
                  %415 = vst [vmem:[%s379 + $0x88] sm:$0xff] %v414
                  %v416 = vld [vmem:[%s378 + $0x120] sm:$0xff]
                  %417 = vst [vmem:[%s379 + $0x90] sm:$0xff] %v416
                  %v418 = vld [vmem:[%s378 + $0x130] sm:$0xff]
                  %419 = vst [vmem:[%s379 + $0x98] sm:$0xff] %v418
                  %v420 = vld [vmem:[%s378 + $0x140] sm:$0xff]
                  %421 = vst [vmem:[%s379 + $0xa0] sm:$0xff] %v420
                  %v422 = vld [vmem:[%s378 + $0x150] sm:$0xff]
                  %423 = vst [vmem:[%s379 + $0xa8] sm:$0xff] %v422
                  %v424 = vld [vmem:[%s378 + $0x160] sm:$0xff]
                  %425 = vst [vmem:[%s379 + $0xb0] sm:$0xff] %v424
                  %v426 = vld [vmem:[%s378 + $0x170] sm:$0xff]
                  %427 = vst [vmem:[%s379 + $0xb8] sm:$0xff] %v426
                  %v428 = vld [vmem:[%s378 + $0x180] sm:$0xff]
                  %429 = vst [vmem:[%s379 + $0xc0] sm:$0xff] %v428
                  %v430 = vld [vmem:[%s378 + $0x190] sm:$0xff]
                  %431 = vst [vmem:[%s379 + $0xc8] sm:$0xff] %v430
                  %v432 = vld [vmem:[%s378 + $0x1a0] sm:$0xff]
                  %433 = vst [vmem:[%s379 + $0xd0] sm:$0xff] %v432
                  %v434 = vld [vmem:[%s378 + $0x1b0] sm:$0xff]
                  %435 = vst [vmem:[%s379 + $0xd8] sm:$0xff] %v434
                  %v436 = vld [vmem:[%s378 + $0x1c0] sm:$0xff]
                  %437 = vst [vmem:[%s379 + $0xe0] sm:$0xff] %v436
                  %v438 = vld [vmem:[%s378 + $0x1d0] sm:$0xff]
                  %439 = vst [vmem:[%s379 + $0xe8] sm:$0xff] %v438
                  %v440 = vld [vmem:[%s378 + $0x1e0] sm:$0xff]
                  %441 = vst [vmem:[%s379 + $0xf0] sm:$0xff] %v440
                  %v442 = vld [vmem:[%s378 + $0x1f0] sm:$0xff]
                  %443 = vst [vmem:[%s379 + $0xf8] sm:$0xff] %v442
                $region80: #{encoder_forward.1} parent=74 // loop_footer
                  %s377 = sadd.s32 1, %s373
                $region81: #{encoder_forward.1} parent=74 // loop_footer_branch
                  %372 = sbr.rel target = $region77
                $region82: #{encoder_forward.1} parent=74 // loop_exit
                  _
              $region75: #{encoder_forward.1} parent=59 // pred_fallthru
                _
              // Predicated region
              $region83: #{encoder_forward.1} parent=59 // pred_check
                _
              $region84: #{encoder_forward.1} parent=59 // pred_check_branch
                %445 = sbr.rel target = $region86
              $region85: #{encoder_forward.1} parent=59 // pred_region
                _
              $region86: #{encoder_forward.1} parent=59 // pred_fallthru
                _
            $region60: #{encoder_forward.1} parent=55 // pred_fallthru
              _
            // Predicated region
            $region61: #{encoder_forward.1} parent=55 // pred_check
              _
            $region62: #{encoder_forward.1} parent=55 // pred_check_branch
              %295 = sbr.rel target = $region64
            $region63: #{encoder_forward.1} parent=55 // pred_region
              %s297 = ssub.s32 256, 1
              loop: start=0, step=1, limit=1
              $region65: #{encoder_forward.1} parent=63 // loop_pre_header
                _
              $region66: #{encoder_forward.1} parent=63 // loop_header
                %s299 = sphi 0, %s303
                %p300 = scmp.ge.s32.totalorder %s299, 1
                %s304 = sphi %s289, %s289
                %s305 = sphi %s287, %s287
              $region67: #{encoder_forward.1} parent=63 // loop_header_branch
                %302 = sbr.rel (%p300) target = $region71
              $region68: #{encoder_forward.1} parent=63 // loop_body
                %v306 = vld [vmem:[%s304] sm:%s297]
                %307 = vst [vmem:[%s305] sm:%s297] %v306
                %v308 = vld [vmem:[%s304 + $0x10] sm:%s297]
                %309 = vst [vmem:[%s305 + $0x8] sm:%s297] %v308
                %v310 = vld [vmem:[%s304 + $0x20] sm:%s297]
                %311 = vst [vmem:[%s305 + $0x10] sm:%s297] %v310
                %v312 = vld [vmem:[%s304 + $0x30] sm:%s297]
                %313 = vst [vmem:[%s305 + $0x18] sm:%s297] %v312
                %v314 = vld [vmem:[%s304 + $0x40] sm:%s297]
                %315 = vst [vmem:[%s305 + $0x20] sm:%s297] %v314
                %v316 = vld [vmem:[%s304 + $0x50] sm:%s297]
                %317 = vst [vmem:[%s305 + $0x28] sm:%s297] %v316
                %v318 = vld [vmem:[%s304 + $0x60] sm:%s297]
                %319 = vst [vmem:[%s305 + $0x30] sm:%s297] %v318
                %v320 = vld [vmem:[%s304 + $0x70] sm:%s297]
                %321 = vst [vmem:[%s305 + $0x38] sm:%s297] %v320
                %v322 = vld [vmem:[%s304 + $0x80] sm:%s297]
                %323 = vst [vmem:[%s305 + $0x40] sm:%s297] %v322
                %v324 = vld [vmem:[%s304 + $0x90] sm:%s297]
                %325 = vst [vmem:[%s305 + $0x48] sm:%s297] %v324
                %v326 = vld [vmem:[%s304 + $0xa0] sm:%s297]
                %327 = vst [vmem:[%s305 + $0x50] sm:%s297] %v326
                %v328 = vld [vmem:[%s304 + $0xb0] sm:%s297]
                %329 = vst [vmem:[%s305 + $0x58] sm:%s297] %v328
                %v330 = vld [vmem:[%s304 + $0xc0] sm:%s297]
                %331 = vst [vmem:[%s305 + $0x60] sm:%s297] %v330
                %v332 = vld [vmem:[%s304 + $0xd0] sm:%s297]
                %333 = vst [vmem:[%s305 + $0x68] sm:%s297] %v332
                %v334 = vld [vmem:[%s304 + $0xe0] sm:%s297]
                %335 = vst [vmem:[%s305 + $0x70] sm:%s297] %v334
                %v336 = vld [vmem:[%s304 + $0xf0] sm:%s297]
                %337 = vst [vmem:[%s305 + $0x78] sm:%s297] %v336
                %v338 = vld [vmem:[%s304 + $0x100] sm:%s297]
                %339 = vst [vmem:[%s305 + $0x80] sm:%s297] %v338
                %v340 = vld [vmem:[%s304 + $0x110] sm:%s297]
                %341 = vst [vmem:[%s305 + $0x88] sm:%s297] %v340
                %v342 = vld [vmem:[%s304 + $0x120] sm:%s297]
                %343 = vst [vmem:[%s305 + $0x90] sm:%s297] %v342
                %v344 = vld [vmem:[%s304 + $0x130] sm:%s297]
                %345 = vst [vmem:[%s305 + $0x98] sm:%s297] %v344
                %v346 = vld [vmem:[%s304 + $0x140] sm:%s297]
                %347 = vst [vmem:[%s305 + $0xa0] sm:%s297] %v346
                %v348 = vld [vmem:[%s304 + $0x150] sm:%s297]
                %349 = vst [vmem:[%s305 + $0xa8] sm:%s297] %v348
                %v350 = vld [vmem:[%s304 + $0x160] sm:%s297]
                %351 = vst [vmem:[%s305 + $0xb0] sm:%s297] %v350
                %v352 = vld [vmem:[%s304 + $0x170] sm:%s297]
                %353 = vst [vmem:[%s305 + $0xb8] sm:%s297] %v352
                %v354 = vld [vmem:[%s304 + $0x180] sm:%s297]
                %355 = vst [vmem:[%s305 + $0xc0] sm:%s297] %v354
                %v356 = vld [vmem:[%s304 + $0x190] sm:%s297]
                %357 = vst [vmem:[%s305 + $0xc8] sm:%s297] %v356
                %v358 = vld [vmem:[%s304 + $0x1a0] sm:%s297]
                %359 = vst [vmem:[%s305 + $0xd0] sm:%s297] %v358
                %v360 = vld [vmem:[%s304 + $0x1b0] sm:%s297]
                %361 = vst [vmem:[%s305 + $0xd8] sm:%s297] %v360
                %v362 = vld [vmem:[%s304 + $0x1c0] sm:%s297]
                %363 = vst [vmem:[%s305 + $0xe0] sm:%s297] %v362
                %v364 = vld [vmem:[%s304 + $0x1d0] sm:%s297]
                %365 = vst [vmem:[%s305 + $0xe8] sm:%s297] %v364
                %v366 = vld [vmem:[%s304 + $0x1e0] sm:%s297]
                %367 = vst [vmem:[%s305 + $0xf0] sm:%s297] %v366
                %v368 = vld [vmem:[%s304 + $0x1f0] sm:%s297]
                %369 = vst [vmem:[%s305 + $0xf8] sm:%s297] %v368
              $region69: #{encoder_forward.1} parent=63 // loop_footer
                %s303 = sadd.s32 1, %s299
              $region70: #{encoder_forward.1} parent=63 // loop_footer_branch
                %298 = sbr.rel target = $region66
              $region71: #{encoder_forward.1} parent=63 // loop_exit
                _
            $region64: #{encoder_forward.1} parent=55 // pred_fallthru
              _
          $region56: #{encoder_forward.1} parent=51 // pred_fallthru
            _
          %446 = vnop
        $region52: #{encoder_forward.1} parent=47 // pred_fallthru
          _
      $region48: #{encoder_forward.1} parent=5 // pred_fallthru
        _
      %p447 = scmp.le.s32.totalorder 1, %s18
      %p448 = scmp.lt.s32.totalorder %s18, 3
      %p449 = pnand %p447, %p448
      %p450 = pneg %p449
      // Predicated region
      $region87: #{encoder_forward.1} parent=5 // pred_check
        _
      $region88: #{encoder_forward.1} parent=5 // pred_check_branch
        %452 = sbr.rel (%p449) target = $region90
      $region89: #{encoder_forward.1} parent=5 // pred_region
        %s453 = ssub.s32 %s18, 1
        %s454 = sand.u32 %s31, 1
        %s455 = sand.u32 %s31, 1
        %s456 = smul.addr %s455, 256
        %s457 = scalar_lea.vmem [#allocation2], %s456
        // Predicated region
        $region91: #{encoder_forward.1} parent=89 // pred_check
          %p458 = pneg %p44
        $region92: #{encoder_forward.1} parent=89 // pred_check_branch
          %460 = sbr.rel (%p458) target = $region94
        $region93: #{encoder_forward.1} parent=89 // pred_region
          _
        $region94: #{encoder_forward.1} parent=89 // pred_fallthru
          _
        %s461 = sand.u32 %s31, 1
        %s462 = sand.u32 %s31, 1
        %s463 = smul.addr %s462, 256
        %s464 = scalar_lea.vmem [#allocation2], %s463
        %p465 = pneg %p44
        %p466 = pneg %p41
        %p467 = pneg %p65
        %p468 = pneg %p62
        %p469 = pneg %p86
        %p470 = pneg %p83
        %p471 = pneg %p107
        %p472 = pneg %p104
        %p473 = pneg %p128
        %p474 = pneg %p125
        %p475 = pneg %p149
        %p476 = pneg %p146
        %p477 = pneg %p170
        %p478 = pneg %p167
        %p479 = pneg %p191
        %p480 = pneg %p188
        %p481 = pneg %p212
        %p482 = pneg %p209
        %p483 = pneg %p238
        %p484 = pneg %p235
        %s485 = sand.u32 %s225, 1
        %s486 = scalar_lea.sflag [#allocation4], %s485
        %s487 = sand.u32 %s225, 1
        %s488 = smul.addr %s487, 8
        %s489 = scalar_lea.vmem [#allocation3], %s488
        %v490 = vld [vmem:[%s457] sm:$0xff]
        %v491 = vld [vmem:[%s457 + $0x8] sm:$0xff]
        %v492 = vld [vmem:[%s457 + $0x10] sm:$0xff]
        %v493 = vld [vmem:[%s457 + $0x18] sm:$0xff]
        %v494 = vld [vmem:[%s457 + $0x20] sm:$0xff]
        %v495 = vld [vmem:[%s457 + $0x28] sm:$0xff]
        %v496 = vld [vmem:[%s457 + $0x30] sm:$0xff]
        %v497 = vld [vmem:[%s457 + $0x38] sm:$0xff]
        %v498 = vld [vmem:[%s457 + $0x40] sm:$0xff]
        %v499 = vld [vmem:[%s457 + $0x48] sm:$0xff]
        %v500 = vld [vmem:[%s457 + $0x50] sm:$0xff]
        %v501 = vld [vmem:[%s457 + $0x58] sm:$0xff]
        %v502 = vld [vmem:[%s457 + $0x60] sm:$0xff]
        %v503 = vld [vmem:[%s457 + $0x68] sm:$0xff]
        %v504 = vld [vmem:[%s457 + $0x70] sm:$0xff]
        %v505 = vld [vmem:[%s457 + $0x78] sm:$0xff]
        %v506 = vld [vmem:[%s457 + $0x80] sm:$0xff]
        %v507 = vld [vmem:[%s457 + $0x88] sm:$0xff]
        %v508 = vld [vmem:[%s457 + $0x90] sm:$0xff]
        %v509 = vld [vmem:[%s457 + $0x98] sm:$0xff]
        %v510 = vld [vmem:[%s457 + $0xa0] sm:$0xff]
        %v511 = vld [vmem:[%s457 + $0xa8] sm:$0xff]
        %v512 = vld [vmem:[%s457 + $0xb0] sm:$0xff]
        %v513 = vld [vmem:[%s457 + $0xb8] sm:$0xff]
        %v514 = vld [vmem:[%s457 + $0xc0] sm:$0xff]
        %v515 = vld [vmem:[%s457 + $0xc8] sm:$0xff]
        %v516 = vld [vmem:[%s457 + $0xd0] sm:$0xff]
        %v517 = vld [vmem:[%s457 + $0xd8] sm:$0xff]
        %v518 = vld [vmem:[%s457 + $0xe0] sm:$0xff]
        %v519 = vld [vmem:[%s457 + $0xe8] sm:$0xff]
        %v520 = vld [vmem:[%s457 + $0xf0] sm:$0xff]
        %v521 = vld [vmem:[%s457 + $0xf8] sm:$0xff]
        %v522 = vld [vmem:[%s1] sm:$0xff]
        %v523 = vld [vmem:[%s1 + $0x8] sm:$0xff]
        %v524 = vld [vmem:[%s1 + $0x10] sm:$0xff]
        %v525 = vld [vmem:[%s1 + $0x18] sm:$0xff]
        %v526 = vld [vmem:[%s1 + $0x20] sm:$0xff]
        %v527 = vld [vmem:[%s1 + $0x28] sm:$0xff]
        %v528 = vld [vmem:[%s1 + $0x30] sm:$0xff]
        %v529 = vld [vmem:[%s1 + $0x38] sm:$0xff]
        %v530 = vld [vmem:[%s1 + $0x40] sm:$0xff]
        %v531 = vld [vmem:[%s1 + $0x48] sm:$0xff]
        %v532 = vld [vmem:[%s1 + $0x50] sm:$0xff]
        %v533 = vld [vmem:[%s1 + $0x58] sm:$0xff]
        %s534 = scalar_lea.vmem %s1, 96
        %v535 = vld [vmem:[%s534] sm:$0xff]
        %v536 = vld [vmem:[%s534 + $0x8] sm:$0xff]
        %v537 = vld [vmem:[%s534 + $0x10] sm:$0xff]
        %v538 = vld [vmem:[%s534 + $0x18] sm:$0xff]
        %v539 = vld [vmem:[%s534 + $0x20] sm:$0xff]
        %v540 = vld [vmem:[%s534 + $0x28] sm:$0xff]
        %v541 = vld [vmem:[%s534 + $0x30] sm:$0xff]
        %v542 = vld [vmem:[%s534 + $0x38] sm:$0xff]
        %v543 = vld [vmem:[%s534 + $0x40] sm:$0xff]
        %v544 = vld [vmem:[%s534 + $0x48] sm:$0xff]
        %v545 = vld [vmem:[%s534 + $0x50] sm:$0xff]
        %v546 = vld [vmem:[%s534 + $0x58] sm:$0xff]
        %vm547 = vcmask 785408
        %v549 = vsel %vm547, %v490, 0
        %v552 = vsel %vm547, %v492, 0
        %v555 = vsel %vm547, %v494, 0
        %v558 = vsel %vm547, %v496, 0
        %v561 = vsel %vm547, %v498, 0
        %v564 = vsel %vm547, %v500, 0
        %v567 = vsel %vm547, %v502, 0
        %v570 = vsel %vm547, %v504, 0
        %v573 = vsel %vm547, %v506, 0
        %v576 = vsel %vm547, %v508, 0
        %v579 = vsel %vm547, %v510, 0
        %v582 = vsel %vm547, %v512, 0
        %v585 = vsel %vm547, %v514, 0
        %v588 = vsel %vm547, %v516, 0
        %v591 = vsel %vm547, %v518, 0
        %v594 = vsel %vm547, %v520, 0
        %596 = vmatpush.msra.mxu0 0.0
        %597 = vmatpush.msra.mxu0 0.0
        %598 = vmatpush.msra.mxu0 0.0
        %599 = vmatpush.msra.mxu0 0.0
        %600 = vmatpush.msra.mxu0 %v546
        %601 = vmatpush.msra.mxu0 %v545
        %602 = vmatpush.msra.mxu0 %v544
        %603 = vmatpush.msra.mxu0 %v543
        %604 = vmatpush.msra.mxu0 %v542
        %605 = vmatpush.msra.mxu0 %v541
        %606 = vmatpush.msra.mxu0 %v540
        %607 = vmatpush.msra.mxu0 %v539
        %608 = vmatpush.msra.mxu0 %v538
        %609 = vmatpush.msra.mxu0 %v537
        %610 = vmatpush.msra.mxu0 %v536
        %611 = vmatpush.msra.mxu0 %v535
        %612 = vmatmul.f32.gmra.mxu0 %v549
        %v613 = vpop.f32.mrf.mxu0
        %v614 = vadd.f32 0.0, %v613
        %615 = vmatmul.f32.gmra.mxu0 %v552
        %v616 = vpop.f32.mrf.mxu0
        %v617 = vadd.f32 0.0, %v616
        %618 = vmatmul.f32.gmra.mxu0 %v555
        %v619 = vpop.f32.mrf.mxu0
        %v620 = vadd.f32 0.0, %v619
        %621 = vmatmul.f32.gmra.mxu0 %v558
        %v622 = vpop.f32.mrf.mxu0
        %v623 = vadd.f32 0.0, %v622
        %624 = vmatmul.f32.gmra.mxu0 %v561
        %v625 = vpop.f32.mrf.mxu0
        %v626 = vadd.f32 0.0, %v625
        %627 = vmatmul.f32.gmra.mxu0 %v564
        %v628 = vpop.f32.mrf.mxu0
        %v629 = vadd.f32 0.0, %v628
        %630 = vmatmul.f32.gmra.mxu0 %v567
        %v631 = vpop.f32.mrf.mxu0
        %v632 = vadd.f32 0.0, %v631
        %633 = vmatmul.f32.gmra.mxu0 %v570
        %v634 = vpop.f32.mrf.mxu0
        %v635 = vadd.f32 0.0, %v634
        %636 = vmatmul.f32.gmra.mxu0 %v573
        %v637 = vpop.f32.mrf.mxu0
        %v638 = vadd.f32 0.0, %v637
        %639 = vmatmul.f32.gmra.mxu0 %v576
        %v640 = vpop.f32.mrf.mxu0
        %v641 = vadd.f32 0.0, %v640
        %642 = vmatmul.f32.gmra.mxu0 %v579
        %v643 = vpop.f32.mrf.mxu0
        %v644 = vadd.f32 0.0, %v643
        %645 = vmatmul.f32.gmra.mxu0 %v582
        %v646 = vpop.f32.mrf.mxu0
        %v647 = vadd.f32 0.0, %v646
        %648 = vmatmul.f32.gmra.mxu0 %v585
        %v649 = vpop.f32.mrf.mxu0
        %v650 = vadd.f32 0.0, %v649
        %651 = vmatmul.f32.gmra.mxu0 %v588
        %v652 = vpop.f32.mrf.mxu0
        %v653 = vadd.f32 0.0, %v652
        %654 = vmatmul.f32.gmra.mxu0 %v591
        %v655 = vpop.f32.mrf.mxu0
        %v656 = vadd.f32 0.0, %v655
        %657 = vmatmul.f32.gmra.mxu0 %v594
        %v658 = vpop.f32.mrf.mxu0
        %v659 = vadd.f32 0.0, %v658
        %660 = vdwg.mxu0
        %v662 = vsel %vm547, 0.0, 0
        %v665 = vsel %vm547, %v491, 0
        %v668 = vsel %vm547, %v493, 0
        %v671 = vsel %vm547, %v495, 0
        %v674 = vsel %vm547, %v497, 0
        %v677 = vsel %vm547, %v499, 0
        %v680 = vsel %vm547, %v501, 0
        %v683 = vsel %vm547, %v503, 0
        %v686 = vsel %vm547, %v505, 0
        %v689 = vsel %vm547, %v507, 0
        %v692 = vsel %vm547, %v509, 0
        %v695 = vsel %vm547, %v511, 0
        %v698 = vsel %vm547, %v513, 0
        %v701 = vsel %vm547, %v515, 0
        %v704 = vsel %vm547, %v517, 0
        %v707 = vsel %vm547, %v519, 0
        %709 = vmatpush.msra.mxu0 0.0
        %710 = vmatpush.msra.mxu0 0.0
        %711 = vmatpush.msra.mxu0 0.0
        %712 = vmatpush.msra.mxu0 0.0
        %713 = vmatpush.msra.mxu0 %v533
        %714 = vmatpush.msra.mxu0 %v532
        %715 = vmatpush.msra.mxu0 %v531
        %716 = vmatpush.msra.mxu0 %v530
        %717 = vmatpush.msra.mxu0 %v529
        %718 = vmatpush.msra.mxu0 %v528
        %719 = vmatpush.msra.mxu0 %v527
        %720 = vmatpush.msra.mxu0 %v526
        %721 = vmatpush.msra.mxu0 %v525
        %722 = vmatpush.msra.mxu0 %v524
        %723 = vmatpush.msra.mxu0 %v523
        %724 = vmatpush.msra.mxu0 %v522
        %725 = vmatmul.f32.gmra.mxu0 %v662
        %v726 = vpop.f32.mrf.mxu0
        %v727 = vadd.f32 %v614, %v726
        %728 = vmatmul.f32.gmra.mxu0 %v665
        %v729 = vpop.f32.mrf.mxu0
        %v730 = vadd.f32 %v617, %v729
        %731 = vmatmul.f32.gmra.mxu0 %v668
        %v732 = vpop.f32.mrf.mxu0
        %v733 = vadd.f32 %v620, %v732
        %734 = vmatmul.f32.gmra.mxu0 %v671
        %v735 = vpop.f32.mrf.mxu0
        %v736 = vadd.f32 %v623, %v735
        %737 = vmatmul.f32.gmra.mxu0 %v674
        %v738 = vpop.f32.mrf.mxu0
        %v739 = vadd.f32 %v626, %v738
        %740 = vmatmul.f32.gmra.mxu0 %v677
        %v741 = vpop.f32.mrf.mxu0
        %v742 = vadd.f32 %v629, %v741
        %743 = vmatmul.f32.gmra.mxu0 %v680
        %v744 = vpop.f32.mrf.mxu0
        %v745 = vadd.f32 %v632, %v744
        %746 = vmatmul.f32.gmra.mxu0 %v683
        %v747 = vpop.f32.mrf.mxu0
        %v748 = vadd.f32 %v635, %v747
        %749 = vmatmul.f32.gmra.mxu0 %v686
        %v750 = vpop.f32.mrf.mxu0
        %v751 = vadd.f32 %v638, %v750
        %752 = vmatmul.f32.gmra.mxu0 %v689
        %v753 = vpop.f32.mrf.mxu0
        %v754 = vadd.f32 %v641, %v753
        %755 = vmatmul.f32.gmra.mxu0 %v692
        %v756 = vpop.f32.mrf.mxu0
        %v757 = vadd.f32 %v644, %v756
        %758 = vmatmul.f32.gmra.mxu0 %v695
        %v759 = vpop.f32.mrf.mxu0
        %v760 = vadd.f32 %v647, %v759
        %761 = vmatmul.f32.gmra.mxu0 %v698
        %v762 = vpop.f32.mrf.mxu0
        %v763 = vadd.f32 %v650, %v762
        %764 = vmatmul.f32.gmra.mxu0 %v701
        %v765 = vpop.f32.mrf.mxu0
        %v766 = vadd.f32 %v653, %v765
        %767 = vmatmul.f32.gmra.mxu0 %v704
        %v768 = vpop.f32.mrf.mxu0
        %v769 = vadd.f32 %v656, %v768
        %770 = vmatmul.f32.gmra.mxu0 %v707
        %v771 = vpop.f32.mrf.mxu0
        %v772 = vadd.f32 %v659, %v771
        %773 = vdwg.mxu0
        %s774 = scalar_lea.vmem %s1, 192
        %v775 = vld [vmem:[%s774] sm:$0xff]
        %v776 = vld [vmem:[%s774 + $0x8] sm:$0xff]
        %v777 = vld [vmem:[%s774 + $0x10] sm:$0xff]
        %v778 = vld [vmem:[%s774 + $0x18] sm:$0xff]
        %v779 = vld [vmem:[%s774 + $0x20] sm:$0xff]
        %v780 = vld [vmem:[%s774 + $0x28] sm:$0xff]
        %v781 = vld [vmem:[%s774 + $0x30] sm:$0xff]
        %v782 = vld [vmem:[%s774 + $0x38] sm:$0xff]
        %v783 = vld [vmem:[%s774 + $0x40] sm:$0xff]
        %v784 = vld [vmem:[%s774 + $0x48] sm:$0xff]
        %v785 = vld [vmem:[%s774 + $0x50] sm:$0xff]
        %v786 = vld [vmem:[%s774 + $0x58] sm:$0xff]
        %v788 = vsel %vm547, %v521, 0
        %790 = vmatpush.msra.mxu0 0.0
        %791 = vmatpush.msra.mxu0 0.0
        %792 = vmatpush.msra.mxu0 0.0
        %793 = vmatpush.msra.mxu0 0.0
        %794 = vmatpush.msra.mxu0 %v786
        %795 = vmatpush.msra.mxu0 %v785
        %796 = vmatpush.msra.mxu0 %v784
        %797 = vmatpush.msra.mxu0 %v783
        %798 = vmatpush.msra.mxu0 %v782
        %799 = vmatpush.msra.mxu0 %v781
        %800 = vmatpush.msra.mxu0 %v780
        %801 = vmatpush.msra.mxu0 %v779
        %802 = vmatpush.msra.mxu0 %v778
        %803 = vmatpush.msra.mxu0 %v777
        %804 = vmatpush.msra.mxu0 %v776
        %805 = vmatpush.msra.mxu0 %v775
        %806 = vmatmul.f32.gmra.mxu0 %v665
        %v807 = vpop.f32.mrf.mxu0
        %v808 = vadd.f32 0.0, %v807
        %809 = vmatmul.f32.gmra.mxu0 %v668
        %v810 = vpop.f32.mrf.mxu0
        %v811 = vadd.f32 0.0, %v810
        %812 = vmatmul.f32.gmra.mxu0 %v671
        %v813 = vpop.f32.mrf.mxu0
        %v814 = vadd.f32 0.0, %v813
        %815 = vmatmul.f32.gmra.mxu0 %v674
        %v816 = vpop.f32.mrf.mxu0
        %v817 = vadd.f32 0.0, %v816
        %818 = vmatmul.f32.gmra.mxu0 %v677
        %v819 = vpop.f32.mrf.mxu0
        %v820 = vadd.f32 0.0, %v819
        %821 = vmatmul.f32.gmra.mxu0 %v680
        %v822 = vpop.f32.mrf.mxu0
        %v823 = vadd.f32 0.0, %v822
        %824 = vmatmul.f32.gmra.mxu0 %v683
        %v825 = vpop.f32.mrf.mxu0
        %v826 = vadd.f32 0.0, %v825
        %827 = vmatmul.f32.gmra.mxu0 %v686
        %v828 = vpop.f32.mrf.mxu0
        %v829 = vadd.f32 0.0, %v828
        %830 = vmatmul.f32.gmra.mxu0 %v689
        %v831 = vpop.f32.mrf.mxu0
        %v832 = vadd.f32 0.0, %v831
        %833 = vmatmul.f32.gmra.mxu0 %v692
        %v834 = vpop.f32.mrf.mxu0
        %v835 = vadd.f32 0.0, %v834
        %836 = vmatmul.f32.gmra.mxu0 %v695
        %v837 = vpop.f32.mrf.mxu0
        %v838 = vadd.f32 0.0, %v837
        %839 = vmatmul.f32.gmra.mxu0 %v698
        %v840 = vpop.f32.mrf.mxu0
        %v841 = vadd.f32 0.0, %v840
        %842 = vmatmul.f32.gmra.mxu0 %v701
        %v843 = vpop.f32.mrf.mxu0
        %v844 = vadd.f32 0.0, %v843
        %845 = vmatmul.f32.gmra.mxu0 %v704
        %v846 = vpop.f32.mrf.mxu0
        %v847 = vadd.f32 0.0, %v846
        %848 = vmatmul.f32.gmra.mxu0 %v707
        %v849 = vpop.f32.mrf.mxu0
        %v850 = vadd.f32 0.0, %v849
        %851 = vmatmul.f32.gmra.mxu0 %v788
        %v852 = vpop.f32.mrf.mxu0
        %v853 = vadd.f32 0.0, %v852
        %854 = vdwg.mxu0
        %v855 = vadd.f32 %v727, %v808
        %v856 = vadd.f32 %v730, %v811
        %v857 = vadd.f32 %v733, %v814
        %v858 = vadd.f32 %v736, %v817
        %v859 = vadd.f32 %v739, %v820
        %v860 = vadd.f32 %v742, %v823
        %v861 = vadd.f32 %v745, %v826
        %v862 = vadd.f32 %v748, %v829
        %v863 = vadd.f32 %v751, %v832
        %v864 = vadd.f32 %v754, %v835
        %v865 = vadd.f32 %v757, %v838
        %v866 = vadd.f32 %v760, %v841
        %v867 = vadd.f32 %v763, %v844
        %v868 = vadd.f32 %v766, %v847
        %v869 = vadd.f32 %v769, %v850
        %v870 = vadd.f32 %v772, %v853
        %v871 = vld [vmem:[%s5] sm:$0x1]
        %v873 = vperm.slane %v871, 0
        %v875 = vadd.f32 %v855, %v873
        %v876 = vadd.f32 %v856, %v873
        %v877 = vadd.f32 %v857, %v873
        %v878 = vadd.f32 %v858, %v873
        %v879 = vadd.f32 %v859, %v873
        %v880 = vadd.f32 %v860, %v873
        %v881 = vadd.f32 %v861, %v873
        %v882 = vadd.f32 %v862, %v873
        %v883 = vadd.f32 %v863, %v873
        %v884 = vadd.f32 %v864, %v873
        %v885 = vadd.f32 %v865, %v873
        %v886 = vadd.f32 %v866, %v873
        %v887 = vadd.f32 %v867, %v873
        %v888 = vadd.f32 %v868, %v873
        %v889 = vadd.f32 %v869, %v873
        %v890 = vadd.f32 %v870, %v873
        %v891 = vmul.f32 %v875, 0.5
        %v892 = vmul.f32 %v876, 0.5
        %v893 = vmul.f32 %v877, 0.5
        %v894 = vmul.f32 %v878, 0.5
        %v895 = vmul.f32 %v879, 0.5
        %v896 = vmul.f32 %v880, 0.5
        %v897 = vmul.f32 %v881, 0.5
        %v898 = vmul.f32 %v882, 0.5
        %v899 = vmul.f32 %v883, 0.5
        %v900 = vmul.f32 %v884, 0.5
        %v901 = vmul.f32 %v885, 0.5
        %v902 = vmul.f32 %v886, 0.5
        %v903 = vmul.f32 %v887, 0.5
        %v904 = vmul.f32 %v888, 0.5
        %v905 = vmul.f32 %v889, 0.5
        %v906 = vmul.f32 %v890, 0.5
        %v907 = vmul.f32 %v875, 0.70710677
        %v908 = vmul.f32 %v876, 0.70710677
        %v909 = vmul.f32 %v877, 0.70710677
        %v910 = vmul.f32 %v878, 0.70710677
        %v911 = vmul.f32 %v879, 0.70710677
        %v912 = vmul.f32 %v880, 0.70710677
        %v913 = vmul.f32 %v881, 0.70710677
        %v914 = vmul.f32 %v882, 0.70710677
        %v915 = vmul.f32 %v883, 0.70710677
        %v916 = vmul.f32 %v884, 0.70710677
        %v917 = vmul.f32 %v885, 0.70710677
        %v918 = vmul.f32 %v886, 0.70710677
        %v919 = vmul.f32 %v887, 0.70710677
        %v920 = vmul.f32 %v888, 0.70710677
        %v921 = vmul.f32 %v889, 0.70710677
        %v922 = vmul.f32 %v890, 0.70710677
        %v923 = vmul.f32 %v907, %v907
        %v924 = vmin.f32 16.0, %v923
        %v925 = vmul.f32 %v924, 2.1237322e-06
        %v926 = vadd.f32 %v925, 0.00028619796
        %v927 = vmul.f32 %v924, %v926
        %v928 = vadd.f32 %v927, 0.0036580483
        %v929 = vmul.f32 %v924, %v928
        %v930 = vadd.f32 %v929, 0.05243302
        %v931 = vmul.f32 %v924, %v930
        %v932 = vadd.f32 %v931, 0.18741608
        %v933 = vmul.f32 %v924, %v932
        %v934 = vadd.f32 %v933, 1.1283791
        %v935 = vmul.f32 %v907, %v934
        %v936 = vmul.f32 %v924, 3.8918573e-05
        %v937 = vadd.f32 %v936, 0.001143296
        %v938 = vmul.f32 %v924, %v937
        %v939 = vadd.f32 %v938, 0.014752088
        %v940 = vmul.f32 %v924, %v939
        %v941 = vadd.f32 %v940, 0.112945676
        %v942 = vmul.f32 %v924, %v941
        %v943 = vadd.f32 %v942, 0.4994258
        %v944 = vmul.f32 %v924, %v943
        %v945 = vadd.f32 %v944, 1.0
        %v946 = vrcp.pop %v945
        %v947 = vmul.f32 %v945, %v946
        %v948 = vsub.f32 1.0, %v947
        %v949 = vmul.f32 %v946, %v948
        %v950 = vadd.f32 %v946, %v949
        %vm951 = vweird.f32 %v945
        %vm952 = vweird.f32 %v946
        %vm953 = vmor %vm951, %vm952
        %v954 = vsel %vm953, %v946, %v950
        %v955 = vand.u32 2147483647, %v945
        %vm956 = vcmp.eq.f32.partialorder %v955, 8.507059e+37
        %v957 = vand.u32 %v945, 2147483648
        %v958 = vor.u32 1.1754944e-38, %v957
        %v959 = vsel %vm956, %v958, %v954
        %v960 = vmul.f32 %v935, %v959
        %v961 = vmin.f32 %v960, 1.0
        %v962 = vmax.f32 %v961, -1.0
        %v963 = vmul.f32 %v908, %v908
        %v964 = vmin.f32 16.0, %v963
        %v965 = vmul.f32 %v964, 2.1237322e-06
        %v966 = vadd.f32 %v965, 0.00028619796
        %v967 = vmul.f32 %v964, %v966
        %v968 = vadd.f32 %v967, 0.0036580483
        %v969 = vmul.f32 %v964, %v968
        %v970 = vadd.f32 %v969, 0.05243302
        %v971 = vmul.f32 %v964, %v970
        %v972 = vadd.f32 %v971, 0.18741608
        %v973 = vmul.f32 %v964, %v972
        %v974 = vadd.f32 %v973, 1.1283791
        %v975 = vmul.f32 %v908, %v974
        %v976 = vmul.f32 %v964, 3.8918573e-05
        %v977 = vadd.f32 %v976, 0.001143296
        %v978 = vmul.f32 %v964, %v977
        %v979 = vadd.f32 %v978, 0.014752088
        %v980 = vmul.f32 %v964, %v979
        %v981 = vadd.f32 %v980, 0.112945676
        %v982 = vmul.f32 %v964, %v981
        %v983 = vadd.f32 %v982, 0.4994258
        %v984 = vmul.f32 %v964, %v983
        %v985 = vadd.f32 %v984, 1.0
        %v986 = vrcp.pop %v985
        %v987 = vmul.f32 %v985, %v986
        %v988 = vsub.f32 1.0, %v987
        %v989 = vmul.f32 %v986, %v988
        %v990 = vadd.f32 %v986, %v989
        %vm991 = vweird.f32 %v985
        %vm992 = vweird.f32 %v986
        %vm993 = vmor %vm991, %vm992
        %v994 = vsel %vm993, %v986, %v990
        %v995 = vand.u32 2147483647, %v985
        %vm996 = vcmp.eq.f32.partialorder %v995, 8.507059e+37
        %v997 = vand.u32 %v985, 2147483648
        %v998 = vor.u32 1.1754944e-38, %v997
        %v999 = vsel %vm996, %v998, %v994
        %v1000 = vmul.f32 %v975, %v999
        %v1001 = vmin.f32 %v1000, 1.0
        %v1002 = vmax.f32 %v1001, -1.0
        %v1003 = vmul.f32 %v909, %v909
        %v1004 = vmin.f32 16.0, %v1003
        %v1005 = vmul.f32 %v1004, 2.1237322e-06
        %v1006 = vadd.f32 %v1005, 0.00028619796
        %v1007 = vmul.f32 %v1004, %v1006
        %v1008 = vadd.f32 %v1007, 0.0036580483
        %v1009 = vmul.f32 %v1004, %v1008
        %v1010 = vadd.f32 %v1009, 0.05243302
        %v1011 = vmul.f32 %v1004, %v1010
        %v1012 = vadd.f32 %v1011, 0.18741608
        %v1013 = vmul.f32 %v1004, %v1012
        %v1014 = vadd.f32 %v1013, 1.1283791
        %v1015 = vmul.f32 %v909, %v1014
        %v1016 = vmul.f32 %v1004, 3.8918573e-05
        %v1017 = vadd.f32 %v1016, 0.001143296
        %v1018 = vmul.f32 %v1004, %v1017
        %v1019 = vadd.f32 %v1018, 0.014752088
        %v1020 = vmul.f32 %v1004, %v1019
        %v1021 = vadd.f32 %v1020, 0.112945676
        %v1022 = vmul.f32 %v1004, %v1021
        %v1023 = vadd.f32 %v1022, 0.4994258
        %v1024 = vmul.f32 %v1004, %v1023
        %v1025 = vadd.f32 %v1024, 1.0
        %v1026 = vrcp.pop %v1025
        %v1027 = vmul.f32 %v1025, %v1026
        %v1028 = vsub.f32 1.0, %v1027
        %v1029 = vmul.f32 %v1026, %v1028
        %v1030 = vadd.f32 %v1026, %v1029
        %vm1031 = vweird.f32 %v1025
        %vm1032 = vweird.f32 %v1026
        %vm1033 = vmor %vm1031, %vm1032
        %v1034 = vsel %vm1033, %v1026, %v1030
        %v1035 = vand.u32 2147483647, %v1025
        %vm1036 = vcmp.eq.f32.partialorder %v1035, 8.507059e+37
        %v1037 = vand.u32 %v1025, 2147483648
        %v1038 = vor.u32 1.1754944e-38, %v1037
        %v1039 = vsel %vm1036, %v1038, %v1034
        %v1040 = vmul.f32 %v1015, %v1039
        %v1041 = vmin.f32 %v1040, 1.0
        %v1042 = vmax.f32 %v1041, -1.0
        %v1043 = vmul.f32 %v910, %v910
        %v1044 = vmin.f32 16.0, %v1043
        %v1045 = vmul.f32 %v1044, 2.1237322e-06
        %v1046 = vadd.f32 %v1045, 0.00028619796
        %v1047 = vmul.f32 %v1044, %v1046
        %v1048 = vadd.f32 %v1047, 0.0036580483
        %v1049 = vmul.f32 %v1044, %v1048
        %v1050 = vadd.f32 %v1049, 0.05243302
        %v1051 = vmul.f32 %v1044, %v1050
        %v1052 = vadd.f32 %v1051, 0.18741608
        %v1053 = vmul.f32 %v1044, %v1052
        %v1054 = vadd.f32 %v1053, 1.1283791
        %v1055 = vmul.f32 %v910, %v1054
        %v1056 = vmul.f32 %v1044, 3.8918573e-05
        %v1057 = vadd.f32 %v1056, 0.001143296
        %v1058 = vmul.f32 %v1044, %v1057
        %v1059 = vadd.f32 %v1058, 0.014752088
        %v1060 = vmul.f32 %v1044, %v1059
        %v1061 = vadd.f32 %v1060, 0.112945676
        %v1062 = vmul.f32 %v1044, %v1061
        %v1063 = vadd.f32 %v1062, 0.4994258
        %v1064 = vmul.f32 %v1044, %v1063
        %v1065 = vadd.f32 %v1064, 1.0
        %v1066 = vrcp.pop %v1065
        %v1067 = vmul.f32 %v1065, %v1066
        %v1068 = vsub.f32 1.0, %v1067
        %v1069 = vmul.f32 %v1066, %v1068
        %v1070 = vadd.f32 %v1066, %v1069
        %vm1071 = vweird.f32 %v1065
        %vm1072 = vweird.f32 %v1066
        %vm1073 = vmor %vm1071, %vm1072
        %v1074 = vsel %vm1073, %v1066, %v1070
        %v1075 = vand.u32 2147483647, %v1065
        %vm1076 = vcmp.eq.f32.partialorder %v1075, 8.507059e+37
        %v1077 = vand.u32 %v1065, 2147483648
        %v1078 = vor.u32 1.1754944e-38, %v1077
        %v1079 = vsel %vm1076, %v1078, %v1074
        %v1080 = vmul.f32 %v1055, %v1079
        %v1081 = vmin.f32 %v1080, 1.0
        %v1082 = vmax.f32 %v1081, -1.0
        %v1083 = vmul.f32 %v911, %v911
        %v1084 = vmin.f32 16.0, %v1083
        %v1085 = vmul.f32 %v1084, 2.1237322e-06
        %v1086 = vadd.f32 %v1085, 0.00028619796
        %v1087 = vmul.f32 %v1084, %v1086
        %v1088 = vadd.f32 %v1087, 0.0036580483
        %v1089 = vmul.f32 %v1084, %v1088
        %v1090 = vadd.f32 %v1089, 0.05243302
        %v1091 = vmul.f32 %v1084, %v1090
        %v1092 = vadd.f32 %v1091, 0.18741608
        %v1093 = vmul.f32 %v1084, %v1092
        %v1094 = vadd.f32 %v1093, 1.1283791
        %v1095 = vmul.f32 %v911, %v1094
        %v1096 = vmul.f32 %v1084, 3.8918573e-05
        %v1097 = vadd.f32 %v1096, 0.001143296
        %v1098 = vmul.f32 %v1084, %v1097
        %v1099 = vadd.f32 %v1098, 0.014752088
        %v1100 = vmul.f32 %v1084, %v1099
        %v1101 = vadd.f32 %v1100, 0.112945676
        %v1102 = vmul.f32 %v1084, %v1101
        %v1103 = vadd.f32 %v1102, 0.4994258
        %v1104 = vmul.f32 %v1084, %v1103
        %v1105 = vadd.f32 %v1104, 1.0
        %v1106 = vrcp.pop %v1105
        %v1107 = vmul.f32 %v1105, %v1106
        %v1108 = vsub.f32 1.0, %v1107
        %v1109 = vmul.f32 %v1106, %v1108
        %v1110 = vadd.f32 %v1106, %v1109
        %vm1111 = vweird.f32 %v1105
        %vm1112 = vweird.f32 %v1106
        %vm1113 = vmor %vm1111, %vm1112
        %v1114 = vsel %vm1113, %v1106, %v1110
        %v1115 = vand.u32 2147483647, %v1105
        %vm1116 = vcmp.eq.f32.partialorder %v1115, 8.507059e+37
        %v1117 = vand.u32 %v1105, 2147483648
        %v1118 = vor.u32 1.1754944e-38, %v1117
        %v1119 = vsel %vm1116, %v1118, %v1114
        %v1120 = vmul.f32 %v1095, %v1119
        %v1121 = vmin.f32 %v1120, 1.0
        %v1122 = vmax.f32 %v1121, -1.0
        %v1123 = vmul.f32 %v912, %v912
        %v1124 = vmin.f32 16.0, %v1123
        %v1125 = vmul.f32 %v1124, 2.1237322e-06
        %v1126 = vadd.f32 %v1125, 0.00028619796
        %v1127 = vmul.f32 %v1124, %v1126
        %v1128 = vadd.f32 %v1127, 0.0036580483
        %v1129 = vmul.f32 %v1124, %v1128
        %v1130 = vadd.f32 %v1129, 0.05243302
        %v1131 = vmul.f32 %v1124, %v1130
        %v1132 = vadd.f32 %v1131, 0.18741608
        %v1133 = vmul.f32 %v1124, %v1132
        %v1134 = vadd.f32 %v1133, 1.1283791
        %v1135 = vmul.f32 %v912, %v1134
        %v1136 = vmul.f32 %v1124, 3.8918573e-05
        %v1137 = vadd.f32 %v1136, 0.001143296
        %v1138 = vmul.f32 %v1124, %v1137
        %v1139 = vadd.f32 %v1138, 0.014752088
        %v1140 = vmul.f32 %v1124, %v1139
        %v1141 = vadd.f32 %v1140, 0.112945676
        %v1142 = vmul.f32 %v1124, %v1141
        %v1143 = vadd.f32 %v1142, 0.4994258
        %v1144 = vmul.f32 %v1124, %v1143
        %v1145 = vadd.f32 %v1144, 1.0
        %v1146 = vrcp.pop %v1145
        %v1147 = vmul.f32 %v1145, %v1146
        %v1148 = vsub.f32 1.0, %v1147
        %v1149 = vmul.f32 %v1146, %v1148
        %v1150 = vadd.f32 %v1146, %v1149
        %vm1151 = vweird.f32 %v1145
        %vm1152 = vweird.f32 %v1146
        %vm1153 = vmor %vm1151, %vm1152
        %v1154 = vsel %vm1153, %v1146, %v1150
        %v1155 = vand.u32 2147483647, %v1145
        %vm1156 = vcmp.eq.f32.partialorder %v1155, 8.507059e+37
        %v1157 = vand.u32 %v1145, 2147483648
        %v1158 = vor.u32 1.1754944e-38, %v1157
        %v1159 = vsel %vm1156, %v1158, %v1154
        %v1160 = vmul.f32 %v1135, %v1159
        %v1161 = vmin.f32 %v1160, 1.0
        %v1162 = vmax.f32 %v1161, -1.0
        %v1163 = vmul.f32 %v913, %v913
        %v1164 = vmin.f32 16.0, %v1163
        %v1165 = vmul.f32 %v1164, 2.1237322e-06
        %v1166 = vadd.f32 %v1165, 0.00028619796
        %v1167 = vmul.f32 %v1164, %v1166
        %v1168 = vadd.f32 %v1167, 0.0036580483
        %v1169 = vmul.f32 %v1164, %v1168
        %v1170 = vadd.f32 %v1169, 0.05243302
        %v1171 = vmul.f32 %v1164, %v1170
        %v1172 = vadd.f32 %v1171, 0.18741608
        %v1173 = vmul.f32 %v1164, %v1172
        %v1174 = vadd.f32 %v1173, 1.1283791
        %v1175 = vmul.f32 %v913, %v1174
        %v1176 = vmul.f32 %v1164, 3.8918573e-05
        %v1177 = vadd.f32 %v1176, 0.001143296
        %v1178 = vmul.f32 %v1164, %v1177
        %v1179 = vadd.f32 %v1178, 0.014752088
        %v1180 = vmul.f32 %v1164, %v1179
        %v1181 = vadd.f32 %v1180, 0.112945676
        %v1182 = vmul.f32 %v1164, %v1181
        %v1183 = vadd.f32 %v1182, 0.4994258
        %v1184 = vmul.f32 %v1164, %v1183
        %v1185 = vadd.f32 %v1184, 1.0
        %v1186 = vrcp.pop %v1185
        %v1187 = vmul.f32 %v1185, %v1186
        %v1188 = vsub.f32 1.0, %v1187
        %v1189 = vmul.f32 %v1186, %v1188
        %v1190 = vadd.f32 %v1186, %v1189
        %vm1191 = vweird.f32 %v1185
        %vm1192 = vweird.f32 %v1186
        %vm1193 = vmor %vm1191, %vm1192
        %v1194 = vsel %vm1193, %v1186, %v1190
        %v1195 = vand.u32 2147483647, %v1185
        %vm1196 = vcmp.eq.f32.partialorder %v1195, 8.507059e+37
        %v1197 = vand.u32 %v1185, 2147483648
        %v1198 = vor.u32 1.1754944e-38, %v1197
        %v1199 = vsel %vm1196, %v1198, %v1194
        %v1200 = vmul.f32 %v1175, %v1199
        %v1201 = vmin.f32 %v1200, 1.0
        %v1202 = vmax.f32 %v1201, -1.0
        %v1203 = vmul.f32 %v914, %v914
        %v1204 = vmin.f32 16.0, %v1203
        %v1205 = vmul.f32 %v1204, 2.1237322e-06
        %v1206 = vadd.f32 %v1205, 0.00028619796
        %v1207 = vmul.f32 %v1204, %v1206
        %v1208 = vadd.f32 %v1207, 0.0036580483
        %v1209 = vmul.f32 %v1204, %v1208
        %v1210 = vadd.f32 %v1209, 0.05243302
        %v1211 = vmul.f32 %v1204, %v1210
        %v1212 = vadd.f32 %v1211, 0.18741608
        %v1213 = vmul.f32 %v1204, %v1212
        %v1214 = vadd.f32 %v1213, 1.1283791
        %v1215 = vmul.f32 %v914, %v1214
        %v1216 = vmul.f32 %v1204, 3.8918573e-05
        %v1217 = vadd.f32 %v1216, 0.001143296
        %v1218 = vmul.f32 %v1204, %v1217
        %v1219 = vadd.f32 %v1218, 0.014752088
        %v1220 = vmul.f32 %v1204, %v1219
        %v1221 = vadd.f32 %v1220, 0.112945676
        %v1222 = vmul.f32 %v1204, %v1221
        %v1223 = vadd.f32 %v1222, 0.4994258
        %v1224 = vmul.f32 %v1204, %v1223
        %v1225 = vadd.f32 %v1224, 1.0
        %v1226 = vrcp.pop %v1225
        %v1227 = vmul.f32 %v1225, %v1226
        %v1228 = vsub.f32 1.0, %v1227
        %v1229 = vmul.f32 %v1226, %v1228
        %v1230 = vadd.f32 %v1226, %v1229
        %vm1231 = vweird.f32 %v1225
        %vm1232 = vweird.f32 %v1226
        %vm1233 = vmor %vm1231, %vm1232
        %v1234 = vsel %vm1233, %v1226, %v1230
        %v1235 = vand.u32 2147483647, %v1225
        %vm1236 = vcmp.eq.f32.partialorder %v1235, 8.507059e+37
        %v1237 = vand.u32 %v1225, 2147483648
        %v1238 = vor.u32 1.1754944e-38, %v1237
        %v1239 = vsel %vm1236, %v1238, %v1234
        %v1240 = vmul.f32 %v1215, %v1239
        %v1241 = vmin.f32 %v1240, 1.0
        %v1242 = vmax.f32 %v1241, -1.0
        %v1243 = vmul.f32 %v915, %v915
        %v1244 = vmin.f32 16.0, %v1243
        %v1245 = vmul.f32 %v1244, 2.1237322e-06
        %v1246 = vadd.f32 %v1245, 0.00028619796
        %v1247 = vmul.f32 %v1244, %v1246
        %v1248 = vadd.f32 %v1247, 0.0036580483
        %v1249 = vmul.f32 %v1244, %v1248
        %v1250 = vadd.f32 %v1249, 0.05243302
        %v1251 = vmul.f32 %v1244, %v1250
        %v1252 = vadd.f32 %v1251, 0.18741608
        %v1253 = vmul.f32 %v1244, %v1252
        %v1254 = vadd.f32 %v1253, 1.1283791
        %v1255 = vmul.f32 %v915, %v1254
        %v1256 = vmul.f32 %v1244, 3.8918573e-05
        %v1257 = vadd.f32 %v1256, 0.001143296
        %v1258 = vmul.f32 %v1244, %v1257
        %v1259 = vadd.f32 %v1258, 0.014752088
        %v1260 = vmul.f32 %v1244, %v1259
        %v1261 = vadd.f32 %v1260, 0.112945676
        %v1262 = vmul.f32 %v1244, %v1261
        %v1263 = vadd.f32 %v1262, 0.4994258
        %v1264 = vmul.f32 %v1244, %v1263
        %v1265 = vadd.f32 %v1264, 1.0
        %v1266 = vrcp.pop %v1265
        %v1267 = vmul.f32 %v1265, %v1266
        %v1268 = vsub.f32 1.0, %v1267
        %v1269 = vmul.f32 %v1266, %v1268
        %v1270 = vadd.f32 %v1266, %v1269
        %vm1271 = vweird.f32 %v1265
        %vm1272 = vweird.f32 %v1266
        %vm1273 = vmor %vm1271, %vm1272
        %v1274 = vsel %vm1273, %v1266, %v1270
        %v1275 = vand.u32 2147483647, %v1265
        %vm1276 = vcmp.eq.f32.partialorder %v1275, 8.507059e+37
        %v1277 = vand.u32 %v1265, 2147483648
        %v1278 = vor.u32 1.1754944e-38, %v1277
        %v1279 = vsel %vm1276, %v1278, %v1274
        %v1280 = vmul.f32 %v1255, %v1279
        %v1281 = vmin.f32 %v1280, 1.0
        %v1282 = vmax.f32 %v1281, -1.0
        %v1283 = vmul.f32 %v916, %v916
        %v1284 = vmin.f32 16.0, %v1283
        %v1285 = vmul.f32 %v1284, 2.1237322e-06
        %v1286 = vadd.f32 %v1285, 0.00028619796
        %v1287 = vmul.f32 %v1284, %v1286
        %v1288 = vadd.f32 %v1287, 0.0036580483
        %v1289 = vmul.f32 %v1284, %v1288
        %v1290 = vadd.f32 %v1289, 0.05243302
        %v1291 = vmul.f32 %v1284, %v1290
        %v1292 = vadd.f32 %v1291, 0.18741608
        %v1293 = vmul.f32 %v1284, %v1292
        %v1294 = vadd.f32 %v1293, 1.1283791
        %v1295 = vmul.f32 %v916, %v1294
        %v1296 = vmul.f32 %v1284, 3.8918573e-05
        %v1297 = vadd.f32 %v1296, 0.001143296
        %v1298 = vmul.f32 %v1284, %v1297
        %v1299 = vadd.f32 %v1298, 0.014752088
        %v1300 = vmul.f32 %v1284, %v1299
        %v1301 = vadd.f32 %v1300, 0.112945676
        %v1302 = vmul.f32 %v1284, %v1301
        %v1303 = vadd.f32 %v1302, 0.4994258
        %v1304 = vmul.f32 %v1284, %v1303
        %v1305 = vadd.f32 %v1304, 1.0
        %v1306 = vrcp.pop %v1305
        %v1307 = vmul.f32 %v1305, %v1306
        %v1308 = vsub.f32 1.0, %v1307
        %v1309 = vmul.f32 %v1306, %v1308
        %v1310 = vadd.f32 %v1306, %v1309
        %vm1311 = vweird.f32 %v1305
        %vm1312 = vweird.f32 %v1306
        %vm1313 = vmor %vm1311, %vm1312
        %v1314 = vsel %vm1313, %v1306, %v1310
        %v1315 = vand.u32 2147483647, %v1305
        %vm1316 = vcmp.eq.f32.partialorder %v1315, 8.507059e+37
        %v1317 = vand.u32 %v1305, 2147483648
        %v1318 = vor.u32 1.1754944e-38, %v1317
        %v1319 = vsel %vm1316, %v1318, %v1314
        %v1320 = vmul.f32 %v1295, %v1319
        %v1321 = vmin.f32 %v1320, 1.0
        %v1322 = vmax.f32 %v1321, -1.0
        %v1323 = vmul.f32 %v917, %v917
        %v1324 = vmin.f32 16.0, %v1323
        %v1325 = vmul.f32 %v1324, 2.1237322e-06
        %v1326 = vadd.f32 %v1325, 0.00028619796
        %v1327 = vmul.f32 %v1324, %v1326
        %v1328 = vadd.f32 %v1327, 0.0036580483
        %v1329 = vmul.f32 %v1324, %v1328
        %v1330 = vadd.f32 %v1329, 0.05243302
        %v1331 = vmul.f32 %v1324, %v1330
        %v1332 = vadd.f32 %v1331, 0.18741608
        %v1333 = vmul.f32 %v1324, %v1332
        %v1334 = vadd.f32 %v1333, 1.1283791
        %v1335 = vmul.f32 %v917, %v1334
        %v1336 = vmul.f32 %v1324, 3.8918573e-05
        %v1337 = vadd.f32 %v1336, 0.001143296
        %v1338 = vmul.f32 %v1324, %v1337
        %v1339 = vadd.f32 %v1338, 0.014752088
        %v1340 = vmul.f32 %v1324, %v1339
        %v1341 = vadd.f32 %v1340, 0.112945676
        %v1342 = vmul.f32 %v1324, %v1341
        %v1343 = vadd.f32 %v1342, 0.4994258
        %v1344 = vmul.f32 %v1324, %v1343
        %v1345 = vadd.f32 %v1344, 1.0
        %v1346 = vrcp.pop %v1345
        %v1347 = vmul.f32 %v1345, %v1346
        %v1348 = vsub.f32 1.0, %v1347
        %v1349 = vmul.f32 %v1346, %v1348
        %v1350 = vadd.f32 %v1346, %v1349
        %vm1351 = vweird.f32 %v1345
        %vm1352 = vweird.f32 %v1346
        %vm1353 = vmor %vm1351, %vm1352
        %v1354 = vsel %vm1353, %v1346, %v1350
        %v1355 = vand.u32 2147483647, %v1345
        %vm1356 = vcmp.eq.f32.partialorder %v1355, 8.507059e+37
        %v1357 = vand.u32 %v1345, 2147483648
        %v1358 = vor.u32 1.1754944e-38, %v1357
        %v1359 = vsel %vm1356, %v1358, %v1354
        %v1360 = vmul.f32 %v1335, %v1359
        %v1361 = vmin.f32 %v1360, 1.0
        %v1362 = vmax.f32 %v1361, -1.0
        %v1363 = vmul.f32 %v918, %v918
        %v1364 = vmin.f32 16.0, %v1363
        %v1365 = vmul.f32 %v1364, 2.1237322e-06
        %v1366 = vadd.f32 %v1365, 0.00028619796
        %v1367 = vmul.f32 %v1364, %v1366
        %v1368 = vadd.f32 %v1367, 0.0036580483
        %v1369 = vmul.f32 %v1364, %v1368
        %v1370 = vadd.f32 %v1369, 0.05243302
        %v1371 = vmul.f32 %v1364, %v1370
        %v1372 = vadd.f32 %v1371, 0.18741608
        %v1373 = vmul.f32 %v1364, %v1372
        %v1374 = vadd.f32 %v1373, 1.1283791
        %v1375 = vmul.f32 %v918, %v1374
        %v1376 = vmul.f32 %v1364, 3.8918573e-05
        %v1377 = vadd.f32 %v1376, 0.001143296
        %v1378 = vmul.f32 %v1364, %v1377
        %v1379 = vadd.f32 %v1378, 0.014752088
        %v1380 = vmul.f32 %v1364, %v1379
        %v1381 = vadd.f32 %v1380, 0.112945676
        %v1382 = vmul.f32 %v1364, %v1381
        %v1383 = vadd.f32 %v1382, 0.4994258
        %v1384 = vmul.f32 %v1364, %v1383
        %v1385 = vadd.f32 %v1384, 1.0
        %v1386 = vrcp.pop %v1385
        %v1387 = vmul.f32 %v1385, %v1386
        %v1388 = vsub.f32 1.0, %v1387
        %v1389 = vmul.f32 %v1386, %v1388
        %v1390 = vadd.f32 %v1386, %v1389
        %vm1391 = vweird.f32 %v1385
        %vm1392 = vweird.f32 %v1386
        %vm1393 = vmor %vm1391, %vm1392
        %v1394 = vsel %vm1393, %v1386, %v1390
        %v1395 = vand.u32 2147483647, %v1385
        %vm1396 = vcmp.eq.f32.partialorder %v1395, 8.507059e+37
        %v1397 = vand.u32 %v1385, 2147483648
        %v1398 = vor.u32 1.1754944e-38, %v1397
        %v1399 = vsel %vm1396, %v1398, %v1394
        %v1400 = vmul.f32 %v1375, %v1399
        %v1401 = vmin.f32 %v1400, 1.0
        %v1402 = vmax.f32 %v1401, -1.0
        %v1403 = vmul.f32 %v919, %v919
        %v1404 = vmin.f32 16.0, %v1403
        %v1405 = vmul.f32 %v1404, 2.1237322e-06
        %v1406 = vadd.f32 %v1405, 0.00028619796
        %v1407 = vmul.f32 %v1404, %v1406
        %v1408 = vadd.f32 %v1407, 0.0036580483
        %v1409 = vmul.f32 %v1404, %v1408
        %v1410 = vadd.f32 %v1409, 0.05243302
        %v1411 = vmul.f32 %v1404, %v1410
        %v1412 = vadd.f32 %v1411, 0.18741608
        %v1413 = vmul.f32 %v1404, %v1412
        %v1414 = vadd.f32 %v1413, 1.1283791
        %v1415 = vmul.f32 %v919, %v1414
        %v1416 = vmul.f32 %v1404, 3.8918573e-05
        %v1417 = vadd.f32 %v1416, 0.001143296
        %v1418 = vmul.f32 %v1404, %v1417
        %v1419 = vadd.f32 %v1418, 0.014752088
        %v1420 = vmul.f32 %v1404, %v1419
        %v1421 = vadd.f32 %v1420, 0.112945676
        %v1422 = vmul.f32 %v1404, %v1421
        %v1423 = vadd.f32 %v1422, 0.4994258
        %v1424 = vmul.f32 %v1404, %v1423
        %v1425 = vadd.f32 %v1424, 1.0
        %v1426 = vrcp.pop %v1425
        %v1427 = vmul.f32 %v1425, %v1426
        %v1428 = vsub.f32 1.0, %v1427
        %v1429 = vmul.f32 %v1426, %v1428
        %v1430 = vadd.f32 %v1426, %v1429
        %vm1431 = vweird.f32 %v1425
        %vm1432 = vweird.f32 %v1426
        %vm1433 = vmor %vm1431, %vm1432
        %v1434 = vsel %vm1433, %v1426, %v1430
        %v1435 = vand.u32 2147483647, %v1425
        %vm1436 = vcmp.eq.f32.partialorder %v1435, 8.507059e+37
        %v1437 = vand.u32 %v1425, 2147483648
        %v1438 = vor.u32 1.1754944e-38, %v1437
        %v1439 = vsel %vm1436, %v1438, %v1434
        %v1440 = vmul.f32 %v1415, %v1439
        %v1441 = vmin.f32 %v1440, 1.0
        %v1442 = vmax.f32 %v1441, -1.0
        %v1443 = vmul.f32 %v920, %v920
        %v1444 = vmin.f32 16.0, %v1443
        %v1445 = vmul.f32 %v1444, 2.1237322e-06
        %v1446 = vadd.f32 %v1445, 0.00028619796
        %v1447 = vmul.f32 %v1444, %v1446
        %v1448 = vadd.f32 %v1447, 0.0036580483
        %v1449 = vmul.f32 %v1444, %v1448
        %v1450 = vadd.f32 %v1449, 0.05243302
        %v1451 = vmul.f32 %v1444, %v1450
        %v1452 = vadd.f32 %v1451, 0.18741608
        %v1453 = vmul.f32 %v1444, %v1452
        %v1454 = vadd.f32 %v1453, 1.1283791
        %v1455 = vmul.f32 %v920, %v1454
        %v1456 = vmul.f32 %v1444, 3.8918573e-05
        %v1457 = vadd.f32 %v1456, 0.001143296
        %v1458 = vmul.f32 %v1444, %v1457
        %v1459 = vadd.f32 %v1458, 0.014752088
        %v1460 = vmul.f32 %v1444, %v1459
        %v1461 = vadd.f32 %v1460, 0.112945676
        %v1462 = vmul.f32 %v1444, %v1461
        %v1463 = vadd.f32 %v1462, 0.4994258
        %v1464 = vmul.f32 %v1444, %v1463
        %v1465 = vadd.f32 %v1464, 1.0
        %v1466 = vrcp.pop %v1465
        %v1467 = vmul.f32 %v1465, %v1466
        %v1468 = vsub.f32 1.0, %v1467
        %v1469 = vmul.f32 %v1466, %v1468
        %v1470 = vadd.f32 %v1466, %v1469
        %vm1471 = vweird.f32 %v1465
        %vm1472 = vweird.f32 %v1466
        %vm1473 = vmor %vm1471, %vm1472
        %v1474 = vsel %vm1473, %v1466, %v1470
        %v1475 = vand.u32 2147483647, %v1465
        %vm1476 = vcmp.eq.f32.partialorder %v1475, 8.507059e+37
        %v1477 = vand.u32 %v1465, 2147483648
        %v1478 = vor.u32 1.1754944e-38, %v1477
        %v1479 = vsel %vm1476, %v1478, %v1474
        %v1480 = vmul.f32 %v1455, %v1479
        %v1481 = vmin.f32 %v1480, 1.0
        %v1482 = vmax.f32 %v1481, -1.0
        %v1483 = vmul.f32 %v921, %v921
        %v1484 = vmin.f32 16.0, %v1483
        %v1485 = vmul.f32 %v1484, 2.1237322e-06
        %v1486 = vadd.f32 %v1485, 0.00028619796
        %v1487 = vmul.f32 %v1484, %v1486
        %v1488 = vadd.f32 %v1487, 0.0036580483
        %v1489 = vmul.f32 %v1484, %v1488
        %v1490 = vadd.f32 %v1489, 0.05243302
        %v1491 = vmul.f32 %v1484, %v1490
        %v1492 = vadd.f32 %v1491, 0.18741608
        %v1493 = vmul.f32 %v1484, %v1492
        %v1494 = vadd.f32 %v1493, 1.1283791
        %v1495 = vmul.f32 %v921, %v1494
        %v1496 = vmul.f32 %v1484, 3.8918573e-05
        %v1497 = vadd.f32 %v1496, 0.001143296
        %v1498 = vmul.f32 %v1484, %v1497
        %v1499 = vadd.f32 %v1498, 0.014752088
        %v1500 = vmul.f32 %v1484, %v1499
        %v1501 = vadd.f32 %v1500, 0.112945676
        %v1502 = vmul.f32 %v1484, %v1501
        %v1503 = vadd.f32 %v1502, 0.4994258
        %v1504 = vmul.f32 %v1484, %v1503
        %v1505 = vadd.f32 %v1504, 1.0
        %v1506 = vrcp.pop %v1505
        %v1507 = vmul.f32 %v1505, %v1506
        %v1508 = vsub.f32 1.0, %v1507
        %v1509 = vmul.f32 %v1506, %v1508
        %v1510 = vadd.f32 %v1506, %v1509
        %vm1511 = vweird.f32 %v1505
        %vm1512 = vweird.f32 %v1506
        %vm1513 = vmor %vm1511, %vm1512
        %v1514 = vsel %vm1513, %v1506, %v1510
        %v1515 = vand.u32 2147483647, %v1505
        %vm1516 = vcmp.eq.f32.partialorder %v1515, 8.507059e+37
        %v1517 = vand.u32 %v1505, 2147483648
        %v1518 = vor.u32 1.1754944e-38, %v1517
        %v1519 = vsel %vm1516, %v1518, %v1514
        %v1520 = vmul.f32 %v1495, %v1519
        %v1521 = vmin.f32 %v1520, 1.0
        %v1522 = vmax.f32 %v1521, -1.0
        %v1523 = vmul.f32 %v922, %v922
        %v1524 = vmin.f32 16.0, %v1523
        %v1525 = vmul.f32 %v1524, 2.1237322e-06
        %v1526 = vadd.f32 %v1525, 0.00028619796
        %v1527 = vmul.f32 %v1524, %v1526
        %v1528 = vadd.f32 %v1527, 0.0036580483
        %v1529 = vmul.f32 %v1524, %v1528
        %v1530 = vadd.f32 %v1529, 0.05243302
        %v1531 = vmul.f32 %v1524, %v1530
        %v1532 = vadd.f32 %v1531, 0.18741608
        %v1533 = vmul.f32 %v1524, %v1532
        %v1534 = vadd.f32 %v1533, 1.1283791
        %v1535 = vmul.f32 %v922, %v1534
        %v1536 = vmul.f32 %v1524, 3.8918573e-05
        %v1537 = vadd.f32 %v1536, 0.001143296
        %v1538 = vmul.f32 %v1524, %v1537
        %v1539 = vadd.f32 %v1538, 0.014752088
        %v1540 = vmul.f32 %v1524, %v1539
        %v1541 = vadd.f32 %v1540, 0.112945676
        %v1542 = vmul.f32 %v1524, %v1541
        %v1543 = vadd.f32 %v1542, 0.4994258
        %v1544 = vmul.f32 %v1524, %v1543
        %v1545 = vadd.f32 %v1544, 1.0
        %v1546 = vrcp.pop %v1545
        %v1547 = vmul.f32 %v1545, %v1546
        %v1548 = vsub.f32 1.0, %v1547
        %v1549 = vmul.f32 %v1546, %v1548
        %v1550 = vadd.f32 %v1546, %v1549
        %vm1551 = vweird.f32 %v1545
        %vm1552 = vweird.f32 %v1546
        %vm1553 = vmor %vm1551, %vm1552
        %v1554 = vsel %vm1553, %v1546, %v1550
        %v1555 = vand.u32 2147483647, %v1545
        %vm1556 = vcmp.eq.f32.partialorder %v1555, 8.507059e+37
        %v1557 = vand.u32 %v1545, 2147483648
        %v1558 = vor.u32 1.1754944e-38, %v1557
        %v1559 = vsel %vm1556, %v1558, %v1554
        %v1560 = vmul.f32 %v1535, %v1559
        %v1561 = vmin.f32 %v1560, 1.0
        %v1562 = vmax.f32 %v1561, -1.0
        %v1563 = vadd.f32 %v962, 1.0
        %v1564 = vadd.f32 %v1002, 1.0
        %v1565 = vadd.f32 %v1042, 1.0
        %v1566 = vadd.f32 %v1082, 1.0
        %v1567 = vadd.f32 %v1122, 1.0
        %v1568 = vadd.f32 %v1162, 1.0
        %v1569 = vadd.f32 %v1202, 1.0
        %v1570 = vadd.f32 %v1242, 1.0
        %v1571 = vadd.f32 %v1282, 1.0
        %v1572 = vadd.f32 %v1322, 1.0
        %v1573 = vadd.f32 %v1362, 1.0
        %v1574 = vadd.f32 %v1402, 1.0
        %v1575 = vadd.f32 %v1442, 1.0
        %v1576 = vadd.f32 %v1482, 1.0
        %v1577 = vadd.f32 %v1522, 1.0
        %v1578 = vadd.f32 %v1562, 1.0
        %v1579 = vmul.f32 %v891, %v1563
        %v1580 = vmul.f32 %v892, %v1564
        %v1581 = vmul.f32 %v893, %v1565
        %v1582 = vmul.f32 %v894, %v1566
        %v1583 = vmul.f32 %v895, %v1567
        %v1584 = vmul.f32 %v896, %v1568
        %v1585 = vmul.f32 %v897, %v1569
        %v1586 = vmul.f32 %v898, %v1570
        %v1587 = vmul.f32 %v899, %v1571
        %v1588 = vmul.f32 %v900, %v1572
        %v1589 = vmul.f32 %v901, %v1573
        %v1590 = vmul.f32 %v902, %v1574
        %v1591 = vmul.f32 %v903, %v1575
        %v1592 = vmul.f32 %v904, %v1576
        %v1593 = vmul.f32 %v905, %v1577
        %v1594 = vmul.f32 %v906, %v1578
        %v1595 = vld [vmem:[%s2] sm:$0xff]
        %v1596 = vld [vmem:[%s2 + $0x8] sm:$0xff]
        %v1597 = vld [vmem:[%s2 + $0x10] sm:$0xff]
        %v1598 = vld [vmem:[%s2 + $0x18] sm:$0xff]
        %v1599 = vld [vmem:[%s2 + $0x20] sm:$0xff]
        %v1600 = vld [vmem:[%s2 + $0x28] sm:$0xff]
        %v1601 = vld [vmem:[%s2 + $0x30] sm:$0xff]
        %v1602 = vld [vmem:[%s2 + $0x38] sm:$0xff]
        %s1603 = scalar_lea.vmem %s2, 64
        %v1604 = vld [vmem:[%s1603] sm:$0xff]
        %v1605 = vld [vmem:[%s1603 + $0x8] sm:$0xff]
        %v1606 = vld [vmem:[%s1603 + $0x10] sm:$0xff]
        %v1607 = vld [vmem:[%s1603 + $0x18] sm:$0xff]
        %v1608 = vld [vmem:[%s1603 + $0x20] sm:$0xff]
        %v1609 = vld [vmem:[%s1603 + $0x28] sm:$0xff]
        %v1610 = vld [vmem:[%s1603 + $0x30] sm:$0xff]
        %v1611 = vld [vmem:[%s1603 + $0x38] sm:$0xff]
        %vm1612 = vcmask 523264
        %v1614 = vsel %vm1612, %v1579, 0
        %v1617 = vsel %vm1612, %v1581, 0
        %v1620 = vsel %vm1612, %v1583, 0
        %v1623 = vsel %vm1612, %v1585, 0
        %v1626 = vsel %vm1612, %v1587, 0
        %v1629 = vsel %vm1612, %v1589, 0
        %v1632 = vsel %vm1612, %v1591, 0
        %v1635 = vsel %vm1612, %v1593, 0
        %1637 = vmatpush.msra.mxu0 0.0
        %1638 = vmatpush.msra.mxu0 0.0
        %1639 = vmatpush.msra.mxu0 0.0
        %1640 = vmatpush.msra.mxu0 0.0
        %1641 = vmatpush.msra.mxu0 0.0
        %1642 = vmatpush.msra.mxu0 0.0
        %1643 = vmatpush.msra.mxu0 0.0
        %1644 = vmatpush.msra.mxu0 0.0
        %1645 = vmatpush.msra.mxu0 %v1611
        %1646 = vmatpush.msra.mxu0 %v1610
        %1647 = vmatpush.msra.mxu0 %v1609
        %1648 = vmatpush.msra.mxu0 %v1608
        %1649 = vmatpush.msra.mxu0 %v1607
        %1650 = vmatpush.msra.mxu0 %v1606
        %1651 = vmatpush.msra.mxu0 %v1605
        %1652 = vmatpush.msra.mxu0 %v1604
        %1653 = vmatmul.f32.gmra.mxu0 %v1614
        %v1654 = vpop.f32.mrf.mxu0
        %v1655 = vadd.f32 0.0, %v1654
        %1656 = vmatmul.f32.gmra.mxu0 %v1617
        %v1657 = vpop.f32.mrf.mxu0
        %v1658 = vadd.f32 0.0, %v1657
        %1659 = vmatmul.f32.gmra.mxu0 %v1620
        %v1660 = vpop.f32.mrf.mxu0
        %v1661 = vadd.f32 0.0, %v1660
        %1662 = vmatmul.f32.gmra.mxu0 %v1623
        %v1663 = vpop.f32.mrf.mxu0
        %v1664 = vadd.f32 0.0, %v1663
        %1665 = vmatmul.f32.gmra.mxu0 %v1626
        %v1666 = vpop.f32.mrf.mxu0
        %v1667 = vadd.f32 0.0, %v1666
        %1668 = vmatmul.f32.gmra.mxu0 %v1629
        %v1669 = vpop.f32.mrf.mxu0
        %v1670 = vadd.f32 0.0, %v1669
        %1671 = vmatmul.f32.gmra.mxu0 %v1632
        %v1672 = vpop.f32.mrf.mxu0
        %v1673 = vadd.f32 0.0, %v1672
        %1674 = vmatmul.f32.gmra.mxu0 %v1635
        %v1675 = vpop.f32.mrf.mxu0
        %v1676 = vadd.f32 0.0, %v1675
        %1677 = vdwg.mxu0
        %v1678 = vsel %vm1612, 0.0, 0
        %v1681 = vsel %vm1612, %v1580, 0
        %v1684 = vsel %vm1612, %v1582, 0
        %v1687 = vsel %vm1612, %v1584, 0
        %v1690 = vsel %vm1612, %v1586, 0
        %v1693 = vsel %vm1612, %v1588, 0
        %v1696 = vsel %vm1612, %v1590, 0
        %v1699 = vsel %vm1612, %v1592, 0
        %1701 = vmatpush.msra.mxu0 0.0
        %1702 = vmatpush.msra.mxu0 0.0
        %1703 = vmatpush.msra.mxu0 0.0
        %1704 = vmatpush.msra.mxu0 0.0
        %1705 = vmatpush.msra.mxu0 0.0
        %1706 = vmatpush.msra.mxu0 0.0
        %1707 = vmatpush.msra.mxu0 0.0
        %1708 = vmatpush.msra.mxu0 0.0
        %1709 = vmatpush.msra.mxu0 %v1602
        %1710 = vmatpush.msra.mxu0 %v1601
        %1711 = vmatpush.msra.mxu0 %v1600
        %1712 = vmatpush.msra.mxu0 %v1599
        %1713 = vmatpush.msra.mxu0 %v1598
        %1714 = vmatpush.msra.mxu0 %v1597
        %1715 = vmatpush.msra.mxu0 %v1596
        %1716 = vmatpush.msra.mxu0 %v1595
        %1717 = vmatmul.f32.gmra.mxu0 %v1678
        %v1718 = vpop.f32.mrf.mxu0
        %v1719 = vadd.f32 %v1655, %v1718
        %1720 = vmatmul.f32.gmra.mxu0 %v1681
        %v1721 = vpop.f32.mrf.mxu0
        %v1722 = vadd.f32 %v1658, %v1721
        %1723 = vmatmul.f32.gmra.mxu0 %v1684
        %v1724 = vpop.f32.mrf.mxu0
        %v1725 = vadd.f32 %v1661, %v1724
        %1726 = vmatmul.f32.gmra.mxu0 %v1687
        %v1727 = vpop.f32.mrf.mxu0
        %v1728 = vadd.f32 %v1664, %v1727
        %1729 = vmatmul.f32.gmra.mxu0 %v1690
        %v1730 = vpop.f32.mrf.mxu0
        %v1731 = vadd.f32 %v1667, %v1730
        %1732 = vmatmul.f32.gmra.mxu0 %v1693
        %v1733 = vpop.f32.mrf.mxu0
        %v1734 = vadd.f32 %v1670, %v1733
        %1735 = vmatmul.f32.gmra.mxu0 %v1696
        %v1736 = vpop.f32.mrf.mxu0
        %v1737 = vadd.f32 %v1673, %v1736
        %1738 = vmatmul.f32.gmra.mxu0 %v1699
        %v1739 = vpop.f32.mrf.mxu0
        %v1740 = vadd.f32 %v1676, %v1739
        %1741 = vdwg.mxu0
        %s1742 = scalar_lea.vmem %s2, 128
        %v1743 = vld [vmem:[%s1742] sm:$0xff]
        %v1744 = vld [vmem:[%s1742 + $0x8] sm:$0xff]
        %v1745 = vld [vmem:[%s1742 + $0x10] sm:$0xff]
        %v1746 = vld [vmem:[%s1742 + $0x18] sm:$0xff]
        %v1747 = vld [vmem:[%s1742 + $0x20] sm:$0xff]
        %v1748 = vld [vmem:[%s1742 + $0x28] sm:$0xff]
        %v1749 = vld [vmem:[%s1742 + $0x30] sm:$0xff]
        %v1750 = vld [vmem:[%s1742 + $0x38] sm:$0xff]
        %v1752 = vsel %vm1612, %v1594, 0
        %1754 = vmatpush.msra.mxu0 0.0
        %1755 = vmatpush.msra.mxu0 0.0
        %1756 = vmatpush.msra.mxu0 0.0
        %1757 = vmatpush.msra.mxu0 0.0
        %1758 = vmatpush.msra.mxu0 0.0
        %1759 = vmatpush.msra.mxu0 0.0
        %1760 = vmatpush.msra.mxu0 0.0
        %1761 = vmatpush.msra.mxu0 0.0
        %1762 = vmatpush.msra.mxu0 %v1750
        %1763 = vmatpush.msra.mxu0 %v1749
        %1764 = vmatpush.msra.mxu0 %v1748
        %1765 = vmatpush.msra.mxu0 %v1747
        %1766 = vmatpush.msra.mxu0 %v1746
        %1767 = vmatpush.msra.mxu0 %v1745
        %1768 = vmatpush.msra.mxu0 %v1744
        %1769 = vmatpush.msra.mxu0 %v1743
        %1770 = vmatmul.f32.gmra.mxu0 %v1681
        %v1771 = vpop.f32.mrf.mxu0
        %v1772 = vadd.f32 0.0, %v1771
        %1773 = vmatmul.f32.gmra.mxu0 %v1684
        %v1774 = vpop.f32.mrf.mxu0
        %v1775 = vadd.f32 0.0, %v1774
        %1776 = vmatmul.f32.gmra.mxu0 %v1687
        %v1777 = vpop.f32.mrf.mxu0
        %v1778 = vadd.f32 0.0, %v1777
        %1779 = vmatmul.f32.gmra.mxu0 %v1690
        %v1780 = vpop.f32.mrf.mxu0
        %v1781 = vadd.f32 0.0, %v1780
        %1782 = vmatmul.f32.gmra.mxu0 %v1693
        %v1783 = vpop.f32.mrf.mxu0
        %v1784 = vadd.f32 0.0, %v1783
        %1785 = vmatmul.f32.gmra.mxu0 %v1696
        %v1786 = vpop.f32.mrf.mxu0
        %v1787 = vadd.f32 0.0, %v1786
        %1788 = vmatmul.f32.gmra.mxu0 %v1699
        %v1789 = vpop.f32.mrf.mxu0
        %v1790 = vadd.f32 0.0, %v1789
        %1791 = vmatmul.f32.gmra.mxu0 %v1752
        %v1792 = vpop.f32.mrf.mxu0
        %v1793 = vadd.f32 0.0, %v1792
        %1794 = vdwg.mxu0
        %v1795 = vadd.f32 %v1719, %v1772
        %v1796 = vadd.f32 %v1722, %v1775
        %v1797 = vadd.f32 %v1725, %v1778
        %v1798 = vadd.f32 %v1728, %v1781
        %v1799 = vadd.f32 %v1731, %v1784
        %v1800 = vadd.f32 %v1734, %v1787
        %v1801 = vadd.f32 %v1737, %v1790
        %v1802 = vadd.f32 %v1740, %v1793
        %v1803 = vld [vmem:[%s6] sm:$0x1]
        %v1805 = vperm.slane %v1803, 0
        %v1807 = vadd.f32 %v1795, %v1805
        %v1808 = vadd.f32 %v1796, %v1805
        %v1809 = vadd.f32 %v1797, %v1805
        %v1810 = vadd.f32 %v1798, %v1805
        %v1811 = vadd.f32 %v1799, %v1805
        %v1812 = vadd.f32 %v1800, %v1805
        %v1813 = vadd.f32 %v1801, %v1805
        %v1814 = vadd.f32 %v1802, %v1805
        %v1815 = vmul.f32 %v1807, 0.5
        %v1816 = vmul.f32 %v1808, 0.5
        %v1817 = vmul.f32 %v1809, 0.5
        %v1818 = vmul.f32 %v1810, 0.5
        %v1819 = vmul.f32 %v1811, 0.5
        %v1820 = vmul.f32 %v1812, 0.5
        %v1821 = vmul.f32 %v1813, 0.5
        %v1822 = vmul.f32 %v1814, 0.5
        %v1823 = vmul.f32 %v1807, 0.70710677
        %v1824 = vmul.f32 %v1808, 0.70710677
        %v1825 = vmul.f32 %v1809, 0.70710677
        %v1826 = vmul.f32 %v1810, 0.70710677
        %v1827 = vmul.f32 %v1811, 0.70710677
        %v1828 = vmul.f32 %v1812, 0.70710677
        %v1829 = vmul.f32 %v1813, 0.70710677
        %v1830 = vmul.f32 %v1814, 0.70710677
        %v1831 = vmul.f32 %v1823, %v1823
        %v1832 = vmin.f32 16.0, %v1831
        %v1833 = vmul.f32 %v1832, 2.1237322e-06
        %v1834 = vadd.f32 %v1833, 0.00028619796
        %v1835 = vmul.f32 %v1832, %v1834
        %v1836 = vadd.f32 %v1835, 0.0036580483
        %v1837 = vmul.f32 %v1832, %v1836
        %v1838 = vadd.f32 %v1837, 0.05243302
        %v1839 = vmul.f32 %v1832, %v1838
        %v1840 = vadd.f32 %v1839, 0.18741608
        %v1841 = vmul.f32 %v1832, %v1840
        %v1842 = vadd.f32 %v1841, 1.1283791
        %v1843 = vmul.f32 %v1823, %v1842
        %v1844 = vmul.f32 %v1832, 3.8918573e-05
        %v1845 = vadd.f32 %v1844, 0.001143296
        %v1846 = vmul.f32 %v1832, %v1845
        %v1847 = vadd.f32 %v1846, 0.014752088
        %v1848 = vmul.f32 %v1832, %v1847
        %v1849 = vadd.f32 %v1848, 0.112945676
        %v1850 = vmul.f32 %v1832, %v1849
        %v1851 = vadd.f32 %v1850, 0.4994258
        %v1852 = vmul.f32 %v1832, %v1851
        %v1853 = vadd.f32 %v1852, 1.0
        %v1854 = vrcp.pop %v1853
        %v1855 = vmul.f32 %v1853, %v1854
        %v1856 = vsub.f32 1.0, %v1855
        %v1857 = vmul.f32 %v1854, %v1856
        %v1858 = vadd.f32 %v1854, %v1857
        %vm1859 = vweird.f32 %v1853
        %vm1860 = vweird.f32 %v1854
        %vm1861 = vmor %vm1859, %vm1860
        %v1862 = vsel %vm1861, %v1854, %v1858
        %v1863 = vand.u32 2147483647, %v1853
        %vm1864 = vcmp.eq.f32.partialorder %v1863, 8.507059e+37
        %v1865 = vand.u32 %v1853, 2147483648
        %v1866 = vor.u32 1.1754944e-38, %v1865
        %v1867 = vsel %vm1864, %v1866, %v1862
        %v1868 = vmul.f32 %v1843, %v1867
        %v1869 = vmin.f32 %v1868, 1.0
        %v1870 = vmax.f32 %v1869, -1.0
        %v1871 = vmul.f32 %v1824, %v1824
        %v1872 = vmin.f32 16.0, %v1871
        %v1873 = vmul.f32 %v1872, 2.1237322e-06
        %v1874 = vadd.f32 %v1873, 0.00028619796
        %v1875 = vmul.f32 %v1872, %v1874
        %v1876 = vadd.f32 %v1875, 0.0036580483
        %v1877 = vmul.f32 %v1872, %v1876
        %v1878 = vadd.f32 %v1877, 0.05243302
        %v1879 = vmul.f32 %v1872, %v1878
        %v1880 = vadd.f32 %v1879, 0.18741608
        %v1881 = vmul.f32 %v1872, %v1880
        %v1882 = vadd.f32 %v1881, 1.1283791
        %v1883 = vmul.f32 %v1824, %v1882
        %v1884 = vmul.f32 %v1872, 3.8918573e-05
        %v1885 = vadd.f32 %v1884, 0.001143296
        %v1886 = vmul.f32 %v1872, %v1885
        %v1887 = vadd.f32 %v1886, 0.014752088
        %v1888 = vmul.f32 %v1872, %v1887
        %v1889 = vadd.f32 %v1888, 0.112945676
        %v1890 = vmul.f32 %v1872, %v1889
        %v1891 = vadd.f32 %v1890, 0.4994258
        %v1892 = vmul.f32 %v1872, %v1891
        %v1893 = vadd.f32 %v1892, 1.0
        %v1894 = vrcp.pop %v1893
        %v1895 = vmul.f32 %v1893, %v1894
        %v1896 = vsub.f32 1.0, %v1895
        %v1897 = vmul.f32 %v1894, %v1896
        %v1898 = vadd.f32 %v1894, %v1897
        %vm1899 = vweird.f32 %v1893
        %vm1900 = vweird.f32 %v1894
        %vm1901 = vmor %vm1899, %vm1900
        %v1902 = vsel %vm1901, %v1894, %v1898
        %v1903 = vand.u32 2147483647, %v1893
        %vm1904 = vcmp.eq.f32.partialorder %v1903, 8.507059e+37
        %v1905 = vand.u32 %v1893, 2147483648
        %v1906 = vor.u32 1.1754944e-38, %v1905
        %v1907 = vsel %vm1904, %v1906, %v1902
        %v1908 = vmul.f32 %v1883, %v1907
        %v1909 = vmin.f32 %v1908, 1.0
        %v1910 = vmax.f32 %v1909, -1.0
        %v1911 = vmul.f32 %v1825, %v1825
        %v1912 = vmin.f32 16.0, %v1911
        %v1913 = vmul.f32 %v1912, 2.1237322e-06
        %v1914 = vadd.f32 %v1913, 0.00028619796
        %v1915 = vmul.f32 %v1912, %v1914
        %v1916 = vadd.f32 %v1915, 0.0036580483
        %v1917 = vmul.f32 %v1912, %v1916
        %v1918 = vadd.f32 %v1917, 0.05243302
        %v1919 = vmul.f32 %v1912, %v1918
        %v1920 = vadd.f32 %v1919, 0.18741608
        %v1921 = vmul.f32 %v1912, %v1920
        %v1922 = vadd.f32 %v1921, 1.1283791
        %v1923 = vmul.f32 %v1825, %v1922
        %v1924 = vmul.f32 %v1912, 3.8918573e-05
        %v1925 = vadd.f32 %v1924, 0.001143296
        %v1926 = vmul.f32 %v1912, %v1925
        %v1927 = vadd.f32 %v1926, 0.014752088
        %v1928 = vmul.f32 %v1912, %v1927
        %v1929 = vadd.f32 %v1928, 0.112945676
        %v1930 = vmul.f32 %v1912, %v1929
        %v1931 = vadd.f32 %v1930, 0.4994258
        %v1932 = vmul.f32 %v1912, %v1931
        %v1933 = vadd.f32 %v1932, 1.0
        %v1934 = vrcp.pop %v1933
        %v1935 = vmul.f32 %v1933, %v1934
        %v1936 = vsub.f32 1.0, %v1935
        %v1937 = vmul.f32 %v1934, %v1936
        %v1938 = vadd.f32 %v1934, %v1937
        %vm1939 = vweird.f32 %v1933
        %vm1940 = vweird.f32 %v1934
        %vm1941 = vmor %vm1939, %vm1940
        %v1942 = vsel %vm1941, %v1934, %v1938
        %v1943 = vand.u32 2147483647, %v1933
        %vm1944 = vcmp.eq.f32.partialorder %v1943, 8.507059e+37
        %v1945 = vand.u32 %v1933, 2147483648
        %v1946 = vor.u32 1.1754944e-38, %v1945
        %v1947 = vsel %vm1944, %v1946, %v1942
        %v1948 = vmul.f32 %v1923, %v1947
        %v1949 = vmin.f32 %v1948, 1.0
        %v1950 = vmax.f32 %v1949, -1.0
        %v1951 = vmul.f32 %v1826, %v1826
        %v1952 = vmin.f32 16.0, %v1951
        %v1953 = vmul.f32 %v1952, 2.1237322e-06
        %v1954 = vadd.f32 %v1953, 0.00028619796
        %v1955 = vmul.f32 %v1952, %v1954
        %v1956 = vadd.f32 %v1955, 0.0036580483
        %v1957 = vmul.f32 %v1952, %v1956
        %v1958 = vadd.f32 %v1957, 0.05243302
        %v1959 = vmul.f32 %v1952, %v1958
        %v1960 = vadd.f32 %v1959, 0.18741608
        %v1961 = vmul.f32 %v1952, %v1960
        %v1962 = vadd.f32 %v1961, 1.1283791
        %v1963 = vmul.f32 %v1826, %v1962
        %v1964 = vmul.f32 %v1952, 3.8918573e-05
        %v1965 = vadd.f32 %v1964, 0.001143296
        %v1966 = vmul.f32 %v1952, %v1965
        %v1967 = vadd.f32 %v1966, 0.014752088
        %v1968 = vmul.f32 %v1952, %v1967
        %v1969 = vadd.f32 %v1968, 0.112945676
        %v1970 = vmul.f32 %v1952, %v1969
        %v1971 = vadd.f32 %v1970, 0.4994258
        %v1972 = vmul.f32 %v1952, %v1971
        %v1973 = vadd.f32 %v1972, 1.0
        %v1974 = vrcp.pop %v1973
        %v1975 = vmul.f32 %v1973, %v1974
        %v1976 = vsub.f32 1.0, %v1975
        %v1977 = vmul.f32 %v1974, %v1976
        %v1978 = vadd.f32 %v1974, %v1977
        %vm1979 = vweird.f32 %v1973
        %vm1980 = vweird.f32 %v1974
        %vm1981 = vmor %vm1979, %vm1980
        %v1982 = vsel %vm1981, %v1974, %v1978
        %v1983 = vand.u32 2147483647, %v1973
        %vm1984 = vcmp.eq.f32.partialorder %v1983, 8.507059e+37
        %v1985 = vand.u32 %v1973, 2147483648
        %v1986 = vor.u32 1.1754944e-38, %v1985
        %v1987 = vsel %vm1984, %v1986, %v1982
        %v1988 = vmul.f32 %v1963, %v1987
        %v1989 = vmin.f32 %v1988, 1.0
        %v1990 = vmax.f32 %v1989, -1.0
        %v1991 = vmul.f32 %v1827, %v1827
        %v1992 = vmin.f32 16.0, %v1991
        %v1993 = vmul.f32 %v1992, 2.1237322e-06
        %v1994 = vadd.f32 %v1993, 0.00028619796
        %v1995 = vmul.f32 %v1992, %v1994
        %v1996 = vadd.f32 %v1995, 0.0036580483
        %v1997 = vmul.f32 %v1992, %v1996
        %v1998 = vadd.f32 %v1997, 0.05243302
        %v1999 = vmul.f32 %v1992, %v1998
        %v2000 = vadd.f32 %v1999, 0.18741608
        %v2001 = vmul.f32 %v1992, %v2000
        %v2002 = vadd.f32 %v2001, 1.1283791
        %v2003 = vmul.f32 %v1827, %v2002
        %v2004 = vmul.f32 %v1992, 3.8918573e-05
        %v2005 = vadd.f32 %v2004, 0.001143296
        %v2006 = vmul.f32 %v1992, %v2005
        %v2007 = vadd.f32 %v2006, 0.014752088
        %v2008 = vmul.f32 %v1992, %v2007
        %v2009 = vadd.f32 %v2008, 0.112945676
        %v2010 = vmul.f32 %v1992, %v2009
        %v2011 = vadd.f32 %v2010, 0.4994258
        %v2012 = vmul.f32 %v1992, %v2011
        %v2013 = vadd.f32 %v2012, 1.0
        %v2014 = vrcp.pop %v2013
        %v2015 = vmul.f32 %v2013, %v2014
        %v2016 = vsub.f32 1.0, %v2015
        %v2017 = vmul.f32 %v2014, %v2016
        %v2018 = vadd.f32 %v2014, %v2017
        %vm2019 = vweird.f32 %v2013
        %vm2020 = vweird.f32 %v2014
        %vm2021 = vmor %vm2019, %vm2020
        %v2022 = vsel %vm2021, %v2014, %v2018
        %v2023 = vand.u32 2147483647, %v2013
        %vm2024 = vcmp.eq.f32.partialorder %v2023, 8.507059e+37
        %v2025 = vand.u32 %v2013, 2147483648
        %v2026 = vor.u32 1.1754944e-38, %v2025
        %v2027 = vsel %vm2024, %v2026, %v2022
        %v2028 = vmul.f32 %v2003, %v2027
        %v2029 = vmin.f32 %v2028, 1.0
        %v2030 = vmax.f32 %v2029, -1.0
        %v2031 = vmul.f32 %v1828, %v1828
        %v2032 = vmin.f32 16.0, %v2031
        %v2033 = vmul.f32 %v2032, 2.1237322e-06
        %v2034 = vadd.f32 %v2033, 0.00028619796
        %v2035 = vmul.f32 %v2032, %v2034
        %v2036 = vadd.f32 %v2035, 0.0036580483
        %v2037 = vmul.f32 %v2032, %v2036
        %v2038 = vadd.f32 %v2037, 0.05243302
        %v2039 = vmul.f32 %v2032, %v2038
        %v2040 = vadd.f32 %v2039, 0.18741608
        %v2041 = vmul.f32 %v2032, %v2040
        %v2042 = vadd.f32 %v2041, 1.1283791
        %v2043 = vmul.f32 %v1828, %v2042
        %v2044 = vmul.f32 %v2032, 3.8918573e-05
        %v2045 = vadd.f32 %v2044, 0.001143296
        %v2046 = vmul.f32 %v2032, %v2045
        %v2047 = vadd.f32 %v2046, 0.014752088
        %v2048 = vmul.f32 %v2032, %v2047
        %v2049 = vadd.f32 %v2048, 0.112945676
        %v2050 = vmul.f32 %v2032, %v2049
        %v2051 = vadd.f32 %v2050, 0.4994258
        %v2052 = vmul.f32 %v2032, %v2051
        %v2053 = vadd.f32 %v2052, 1.0
        %v2054 = vrcp.pop %v2053
        %v2055 = vmul.f32 %v2053, %v2054
        %v2056 = vsub.f32 1.0, %v2055
        %v2057 = vmul.f32 %v2054, %v2056
        %v2058 = vadd.f32 %v2054, %v2057
        %vm2059 = vweird.f32 %v2053
        %vm2060 = vweird.f32 %v2054
        %vm2061 = vmor %vm2059, %vm2060
        %v2062 = vsel %vm2061, %v2054, %v2058
        %v2063 = vand.u32 2147483647, %v2053
        %vm2064 = vcmp.eq.f32.partialorder %v2063, 8.507059e+37
        %v2065 = vand.u32 %v2053, 2147483648
        %v2066 = vor.u32 1.1754944e-38, %v2065
        %v2067 = vsel %vm2064, %v2066, %v2062
        %v2068 = vmul.f32 %v2043, %v2067
        %v2069 = vmin.f32 %v2068, 1.0
        %v2070 = vmax.f32 %v2069, -1.0
        %v2071 = vmul.f32 %v1829, %v1829
        %v2072 = vmin.f32 16.0, %v2071
        %v2073 = vmul.f32 %v2072, 2.1237322e-06
        %v2074 = vadd.f32 %v2073, 0.00028619796
        %v2075 = vmul.f32 %v2072, %v2074
        %v2076 = vadd.f32 %v2075, 0.0036580483
        %v2077 = vmul.f32 %v2072, %v2076
        %v2078 = vadd.f32 %v2077, 0.05243302
        %v2079 = vmul.f32 %v2072, %v2078
        %v2080 = vadd.f32 %v2079, 0.18741608
        %v2081 = vmul.f32 %v2072, %v2080
        %v2082 = vadd.f32 %v2081, 1.1283791
        %v2083 = vmul.f32 %v1829, %v2082
        %v2084 = vmul.f32 %v2072, 3.8918573e-05
        %v2085 = vadd.f32 %v2084, 0.001143296
        %v2086 = vmul.f32 %v2072, %v2085
        %v2087 = vadd.f32 %v2086, 0.014752088
        %v2088 = vmul.f32 %v2072, %v2087
        %v2089 = vadd.f32 %v2088, 0.112945676
        %v2090 = vmul.f32 %v2072, %v2089
        %v2091 = vadd.f32 %v2090, 0.4994258
        %v2092 = vmul.f32 %v2072, %v2091
        %v2093 = vadd.f32 %v2092, 1.0
        %v2094 = vrcp.pop %v2093
        %v2095 = vmul.f32 %v2093, %v2094
        %v2096 = vsub.f32 1.0, %v2095
        %v2097 = vmul.f32 %v2094, %v2096
        %v2098 = vadd.f32 %v2094, %v2097
        %vm2099 = vweird.f32 %v2093
        %vm2100 = vweird.f32 %v2094
        %vm2101 = vmor %vm2099, %vm2100
        %v2102 = vsel %vm2101, %v2094, %v2098
        %v2103 = vand.u32 2147483647, %v2093
        %vm2104 = vcmp.eq.f32.partialorder %v2103, 8.507059e+37
        %v2105 = vand.u32 %v2093, 2147483648
        %v2106 = vor.u32 1.1754944e-38, %v2105
        %v2107 = vsel %vm2104, %v2106, %v2102
        %v2108 = vmul.f32 %v2083, %v2107
        %v2109 = vmin.f32 %v2108, 1.0
        %v2110 = vmax.f32 %v2109, -1.0
        %v2111 = vmul.f32 %v1830, %v1830
        %v2112 = vmin.f32 16.0, %v2111
        %v2113 = vmul.f32 %v2112, 2.1237322e-06
        %v2114 = vadd.f32 %v2113, 0.00028619796
        %v2115 = vmul.f32 %v2112, %v2114
        %v2116 = vadd.f32 %v2115, 0.0036580483
        %v2117 = vmul.f32 %v2112, %v2116
        %v2118 = vadd.f32 %v2117, 0.05243302
        %v2119 = vmul.f32 %v2112, %v2118
        %v2120 = vadd.f32 %v2119, 0.18741608
        %v2121 = vmul.f32 %v2112, %v2120
        %v2122 = vadd.f32 %v2121, 1.1283791
        %v2123 = vmul.f32 %v1830, %v2122
        %v2124 = vmul.f32 %v2112, 3.8918573e-05
        %v2125 = vadd.f32 %v2124, 0.001143296
        %v2126 = vmul.f32 %v2112, %v2125
        %v2127 = vadd.f32 %v2126, 0.014752088
        %v2128 = vmul.f32 %v2112, %v2127
        %v2129 = vadd.f32 %v2128, 0.112945676
        %v2130 = vmul.f32 %v2112, %v2129
        %v2131 = vadd.f32 %v2130, 0.4994258
        %v2132 = vmul.f32 %v2112, %v2131
        %v2133 = vadd.f32 %v2132, 1.0
        %v2134 = vrcp.pop %v2133
        %v2135 = vmul.f32 %v2133, %v2134
        %v2136 = vsub.f32 1.0, %v2135
        %v2137 = vmul.f32 %v2134, %v2136
        %v2138 = vadd.f32 %v2134, %v2137
        %vm2139 = vweird.f32 %v2133
        %vm2140 = vweird.f32 %v2134
        %vm2141 = vmor %vm2139, %vm2140
        %v2142 = vsel %vm2141, %v2134, %v2138
        %v2143 = vand.u32 2147483647, %v2133
        %vm2144 = vcmp.eq.f32.partialorder %v2143, 8.507059e+37
        %v2145 = vand.u32 %v2133, 2147483648
        %v2146 = vor.u32 1.1754944e-38, %v2145
        %v2147 = vsel %vm2144, %v2146, %v2142
        %v2148 = vmul.f32 %v2123, %v2147
        %v2149 = vmin.f32 %v2148, 1.0
        %v2150 = vmax.f32 %v2149, -1.0
        %v2151 = vadd.f32 %v1870, 1.0
        %v2152 = vadd.f32 %v1910, 1.0
        %v2153 = vadd.f32 %v1950, 1.0
        %v2154 = vadd.f32 %v1990, 1.0
        %v2155 = vadd.f32 %v2030, 1.0
        %v2156 = vadd.f32 %v2070, 1.0
        %v2157 = vadd.f32 %v2110, 1.0
        %v2158 = vadd.f32 %v2150, 1.0
        %v2159 = vmul.f32 %v1815, %v2151
        %v2160 = vmul.f32 %v1816, %v2152
        %v2161 = vmul.f32 %v1817, %v2153
        %v2162 = vmul.f32 %v1818, %v2154
        %v2163 = vmul.f32 %v1819, %v2155
        %v2164 = vmul.f32 %v1820, %v2156
        %v2165 = vmul.f32 %v1821, %v2157
        %v2166 = vmul.f32 %v1822, %v2158
        %v2167 = vld [vmem:[%s3] sm:$0xff]
        %v2168 = vld [vmem:[%s3 + $0x8] sm:$0xff]
        %v2169 = vld [vmem:[%s3 + $0x10] sm:$0xff]
        %v2170 = vld [vmem:[%s3 + $0x18] sm:$0xff]
        %v2171 = vld [vmem:[%s3 + $0x20] sm:$0xff]
        %v2172 = vld [vmem:[%s3 + $0x28] sm:$0xff]
        %v2173 = vld [vmem:[%s3 + $0x30] sm:$0xff]
        %v2174 = vld [vmem:[%s3 + $0x38] sm:$0xff]
        %s2175 = scalar_lea.vmem %s3, 64
        %v2176 = vld [vmem:[%s2175] sm:$0xff]
        %v2177 = vld [vmem:[%s2175 + $0x8] sm:$0xff]
        %v2178 = vld [vmem:[%s2175 + $0x10] sm:$0xff]
        %v2179 = vld [vmem:[%s2175 + $0x18] sm:$0xff]
        %v2180 = vld [vmem:[%s2175 + $0x20] sm:$0xff]
        %v2181 = vld [vmem:[%s2175 + $0x28] sm:$0xff]
        %v2182 = vld [vmem:[%s2175 + $0x30] sm:$0xff]
        %v2183 = vld [vmem:[%s2175 + $0x38] sm:$0xff]
        %v2185 = vsel %vm1612, %v2159, 0
        %v2188 = vsel %vm1612, %v2161, 0
        %v2191 = vsel %vm1612, %v2163, 0
        %v2194 = vsel %vm1612, %v2165, 0
        %2196 = vmatpush.msra.mxu0 0.0
        %2197 = vmatpush.msra.mxu0 0.0
        %2198 = vmatpush.msra.mxu0 0.0
        %2199 = vmatpush.msra.mxu0 0.0
        %2200 = vmatpush.msra.mxu0 0.0
        %2201 = vmatpush.msra.mxu0 0.0
        %2202 = vmatpush.msra.mxu0 0.0
        %2203 = vmatpush.msra.mxu0 0.0
        %2204 = vmatpush.msra.mxu0 %v2183
        %2205 = vmatpush.msra.mxu0 %v2182
        %2206 = vmatpush.msra.mxu0 %v2181
        %2207 = vmatpush.msra.mxu0 %v2180
        %2208 = vmatpush.msra.mxu0 %v2179
        %2209 = vmatpush.msra.mxu0 %v2178
        %2210 = vmatpush.msra.mxu0 %v2177
        %2211 = vmatpush.msra.mxu0 %v2176
        %2212 = vmatmul.f32.gmra.mxu0 %v2185
        %v2213 = vpop.f32.mrf.mxu0
        %v2214 = vadd.f32 0.0, %v2213
        %2215 = vmatmul.f32.gmra.mxu0 %v2188
        %v2216 = vpop.f32.mrf.mxu0
        %v2217 = vadd.f32 0.0, %v2216
        %2218 = vmatmul.f32.gmra.mxu0 %v2191
        %v2219 = vpop.f32.mrf.mxu0
        %v2220 = vadd.f32 0.0, %v2219
        %2221 = vmatmul.f32.gmra.mxu0 %v2194
        %v2222 = vpop.f32.mrf.mxu0
        %v2223 = vadd.f32 0.0, %v2222
        %2224 = vdwg.mxu0
        %v2226 = vsel %vm1612, %v2160, 0
        %v2229 = vsel %vm1612, %v2162, 0
        %v2232 = vsel %vm1612, %v2164, 0
        %2234 = vmatpush.msra.mxu0 0.0
        %2235 = vmatpush.msra.mxu0 0.0
        %2236 = vmatpush.msra.mxu0 0.0
        %2237 = vmatpush.msra.mxu0 0.0
        %2238 = vmatpush.msra.mxu0 0.0
        %2239 = vmatpush.msra.mxu0 0.0
        %2240 = vmatpush.msra.mxu0 0.0
        %2241 = vmatpush.msra.mxu0 0.0
        %2242 = vmatpush.msra.mxu0 %v2174
        %2243 = vmatpush.msra.mxu0 %v2173
        %2244 = vmatpush.msra.mxu0 %v2172
        %2245 = vmatpush.msra.mxu0 %v2171
        %2246 = vmatpush.msra.mxu0 %v2170
        %2247 = vmatpush.msra.mxu0 %v2169
        %2248 = vmatpush.msra.mxu0 %v2168
        %2249 = vmatpush.msra.mxu0 %v2167
        %2250 = vmatmul.f32.gmra.mxu0 %v1678
        %v2251 = vpop.f32.mrf.mxu0
        %v2252 = vadd.f32 %v2214, %v2251
        %2253 = vmatmul.f32.gmra.mxu0 %v2226
        %v2254 = vpop.f32.mrf.mxu0
        %v2255 = vadd.f32 %v2217, %v2254
        %2256 = vmatmul.f32.gmra.mxu0 %v2229
        %v2257 = vpop.f32.mrf.mxu0
        %v2258 = vadd.f32 %v2220, %v2257
        %2259 = vmatmul.f32.gmra.mxu0 %v2232
        %v2260 = vpop.f32.mrf.mxu0
        %v2261 = vadd.f32 %v2223, %v2260
        %2262 = vdwg.mxu0
        %s2263 = scalar_lea.vmem %s3, 128
        %v2264 = vld [vmem:[%s2263] sm:$0xff]
        %v2265 = vld [vmem:[%s2263 + $0x8] sm:$0xff]
        %v2266 = vld [vmem:[%s2263 + $0x10] sm:$0xff]
        %v2267 = vld [vmem:[%s2263 + $0x18] sm:$0xff]
        %v2268 = vld [vmem:[%s2263 + $0x20] sm:$0xff]
        %v2269 = vld [vmem:[%s2263 + $0x28] sm:$0xff]
        %v2270 = vld [vmem:[%s2263 + $0x30] sm:$0xff]
        %v2271 = vld [vmem:[%s2263 + $0x38] sm:$0xff]
        %v2273 = vsel %vm1612, %v2166, 0
        %2275 = vmatpush.msra.mxu0 0.0
        %2276 = vmatpush.msra.mxu0 0.0
        %2277 = vmatpush.msra.mxu0 0.0
        %2278 = vmatpush.msra.mxu0 0.0
        %2279 = vmatpush.msra.mxu0 0.0
        %2280 = vmatpush.msra.mxu0 0.0
        %2281 = vmatpush.msra.mxu0 0.0
        %2282 = vmatpush.msra.mxu0 0.0
        %2283 = vmatpush.msra.mxu0 %v2271
        %2284 = vmatpush.msra.mxu0 %v2270
        %2285 = vmatpush.msra.mxu0 %v2269
        %2286 = vmatpush.msra.mxu0 %v2268
        %2287 = vmatpush.msra.mxu0 %v2267
        %2288 = vmatpush.msra.mxu0 %v2266
        %2289 = vmatpush.msra.mxu0 %v2265
        %2290 = vmatpush.msra.mxu0 %v2264
        %2291 = vmatmul.f32.gmra.mxu0 %v2226
        %v2292 = vpop.f32.mrf.mxu0
        %v2293 = vadd.f32 0.0, %v2292
        %2294 = vmatmul.f32.gmra.mxu0 %v2229
        %v2295 = vpop.f32.mrf.mxu0
        %v2296 = vadd.f32 0.0, %v2295
        %2297 = vmatmul.f32.gmra.mxu0 %v2232
        %v2298 = vpop.f32.mrf.mxu0
        %v2299 = vadd.f32 0.0, %v2298
        %2300 = vmatmul.f32.gmra.mxu0 %v2273
        %v2301 = vpop.f32.mrf.mxu0
        %v2302 = vadd.f32 0.0, %v2301
        %2303 = vdwg.mxu0
        %v2304 = vadd.f32 %v2252, %v2293
        %v2305 = vadd.f32 %v2255, %v2296
        %v2306 = vadd.f32 %v2258, %v2299
        %v2307 = vadd.f32 %v2261, %v2302
        %v2308 = vld [vmem:[%s7] sm:$0x1]
        %v2310 = vperm.slane %v2308, 0
        %v2312 = vadd.f32 %v2304, %v2310
        %v2313 = vadd.f32 %v2305, %v2310
        %v2314 = vadd.f32 %v2306, %v2310
        %v2315 = vadd.f32 %v2307, %v2310
        %v2316 = vmul.f32 %v2312, 0.5
        %v2317 = vmul.f32 %v2313, 0.5
        %v2318 = vmul.f32 %v2314, 0.5
        %v2319 = vmul.f32 %v2315, 0.5
        %v2320 = vmul.f32 %v2312, 0.70710677
        %v2321 = vmul.f32 %v2313, 0.70710677
        %v2322 = vmul.f32 %v2314, 0.70710677
        %v2323 = vmul.f32 %v2315, 0.70710677
        %v2324 = vmul.f32 %v2320, %v2320
        %v2325 = vmin.f32 16.0, %v2324
        %v2326 = vmul.f32 %v2325, 2.1237322e-06
        %v2327 = vadd.f32 %v2326, 0.00028619796
        %v2328 = vmul.f32 %v2325, %v2327
        %v2329 = vadd.f32 %v2328, 0.0036580483
        %v2330 = vmul.f32 %v2325, %v2329
        %v2331 = vadd.f32 %v2330, 0.05243302
        %v2332 = vmul.f32 %v2325, %v2331
        %v2333 = vadd.f32 %v2332, 0.18741608
        %v2334 = vmul.f32 %v2325, %v2333
        %v2335 = vadd.f32 %v2334, 1.1283791
        %v2336 = vmul.f32 %v2320, %v2335
        %v2337 = vmul.f32 %v2325, 3.8918573e-05
        %v2338 = vadd.f32 %v2337, 0.001143296
        %v2339 = vmul.f32 %v2325, %v2338
        %v2340 = vadd.f32 %v2339, 0.014752088
        %v2341 = vmul.f32 %v2325, %v2340
        %v2342 = vadd.f32 %v2341, 0.112945676
        %v2343 = vmul.f32 %v2325, %v2342
        %v2344 = vadd.f32 %v2343, 0.4994258
        %v2345 = vmul.f32 %v2325, %v2344
        %v2346 = vadd.f32 %v2345, 1.0
        %v2347 = vrcp.pop %v2346
        %v2348 = vmul.f32 %v2346, %v2347
        %v2349 = vsub.f32 1.0, %v2348
        %v2350 = vmul.f32 %v2347, %v2349
        %v2351 = vadd.f32 %v2347, %v2350
        %vm2352 = vweird.f32 %v2346
        %vm2353 = vweird.f32 %v2347
        %vm2354 = vmor %vm2352, %vm2353
        %v2355 = vsel %vm2354, %v2347, %v2351
        %v2356 = vand.u32 2147483647, %v2346
        %vm2357 = vcmp.eq.f32.partialorder %v2356, 8.507059e+37
        %v2358 = vand.u32 %v2346, 2147483648
        %v2359 = vor.u32 1.1754944e-38, %v2358
        %v2360 = vsel %vm2357, %v2359, %v2355
        %v2361 = vmul.f32 %v2336, %v2360
        %v2362 = vmin.f32 %v2361, 1.0
        %v2363 = vmax.f32 %v2362, -1.0
        %v2364 = vmul.f32 %v2321, %v2321
        %v2365 = vmin.f32 16.0, %v2364
        %v2366 = vmul.f32 %v2365, 2.1237322e-06
        %v2367 = vadd.f32 %v2366, 0.00028619796
        %v2368 = vmul.f32 %v2365, %v2367
        %v2369 = vadd.f32 %v2368, 0.0036580483
        %v2370 = vmul.f32 %v2365, %v2369
        %v2371 = vadd.f32 %v2370, 0.05243302
        %v2372 = vmul.f32 %v2365, %v2371
        %v2373 = vadd.f32 %v2372, 0.18741608
        %v2374 = vmul.f32 %v2365, %v2373
        %v2375 = vadd.f32 %v2374, 1.1283791
        %v2376 = vmul.f32 %v2321, %v2375
        %v2377 = vmul.f32 %v2365, 3.8918573e-05
        %v2378 = vadd.f32 %v2377, 0.001143296
        %v2379 = vmul.f32 %v2365, %v2378
        %v2380 = vadd.f32 %v2379, 0.014752088
        %v2381 = vmul.f32 %v2365, %v2380
        %v2382 = vadd.f32 %v2381, 0.112945676
        %v2383 = vmul.f32 %v2365, %v2382
        %v2384 = vadd.f32 %v2383, 0.4994258
        %v2385 = vmul.f32 %v2365, %v2384
        %v2386 = vadd.f32 %v2385, 1.0
        %v2387 = vrcp.pop %v2386
        %v2388 = vmul.f32 %v2386, %v2387
        %v2389 = vsub.f32 1.0, %v2388
        %v2390 = vmul.f32 %v2387, %v2389
        %v2391 = vadd.f32 %v2387, %v2390
        %vm2392 = vweird.f32 %v2386
        %vm2393 = vweird.f32 %v2387
        %vm2394 = vmor %vm2392, %vm2393
        %v2395 = vsel %vm2394, %v2387, %v2391
        %v2396 = vand.u32 2147483647, %v2386
        %vm2397 = vcmp.eq.f32.partialorder %v2396, 8.507059e+37
        %v2398 = vand.u32 %v2386, 2147483648
        %v2399 = vor.u32 1.1754944e-38, %v2398
        %v2400 = vsel %vm2397, %v2399, %v2395
        %v2401 = vmul.f32 %v2376, %v2400
        %v2402 = vmin.f32 %v2401, 1.0
        %v2403 = vmax.f32 %v2402, -1.0
        %v2404 = vmul.f32 %v2322, %v2322
        %v2405 = vmin.f32 16.0, %v2404
        %v2406 = vmul.f32 %v2405, 2.1237322e-06
        %v2407 = vadd.f32 %v2406, 0.00028619796
        %v2408 = vmul.f32 %v2405, %v2407
        %v2409 = vadd.f32 %v2408, 0.0036580483
        %v2410 = vmul.f32 %v2405, %v2409
        %v2411 = vadd.f32 %v2410, 0.05243302
        %v2412 = vmul.f32 %v2405, %v2411
        %v2413 = vadd.f32 %v2412, 0.18741608
        %v2414 = vmul.f32 %v2405, %v2413
        %v2415 = vadd.f32 %v2414, 1.1283791
        %v2416 = vmul.f32 %v2322, %v2415
        %v2417 = vmul.f32 %v2405, 3.8918573e-05
        %v2418 = vadd.f32 %v2417, 0.001143296
        %v2419 = vmul.f32 %v2405, %v2418
        %v2420 = vadd.f32 %v2419, 0.014752088
        %v2421 = vmul.f32 %v2405, %v2420
        %v2422 = vadd.f32 %v2421, 0.112945676
        %v2423 = vmul.f32 %v2405, %v2422
        %v2424 = vadd.f32 %v2423, 0.4994258
        %v2425 = vmul.f32 %v2405, %v2424
        %v2426 = vadd.f32 %v2425, 1.0
        %v2427 = vrcp.pop %v2426
        %v2428 = vmul.f32 %v2426, %v2427
        %v2429 = vsub.f32 1.0, %v2428
        %v2430 = vmul.f32 %v2427, %v2429
        %v2431 = vadd.f32 %v2427, %v2430
        %vm2432 = vweird.f32 %v2426
        %vm2433 = vweird.f32 %v2427
        %vm2434 = vmor %vm2432, %vm2433
        %v2435 = vsel %vm2434, %v2427, %v2431
        %v2436 = vand.u32 2147483647, %v2426
        %vm2437 = vcmp.eq.f32.partialorder %v2436, 8.507059e+37
        %v2438 = vand.u32 %v2426, 2147483648
        %v2439 = vor.u32 1.1754944e-38, %v2438
        %v2440 = vsel %vm2437, %v2439, %v2435
        %v2441 = vmul.f32 %v2416, %v2440
        %v2442 = vmin.f32 %v2441, 1.0
        %v2443 = vmax.f32 %v2442, -1.0
        %v2444 = vmul.f32 %v2323, %v2323
        %v2445 = vmin.f32 16.0, %v2444
        %v2446 = vmul.f32 %v2445, 2.1237322e-06
        %v2447 = vadd.f32 %v2446, 0.00028619796
        %v2448 = vmul.f32 %v2445, %v2447
        %v2449 = vadd.f32 %v2448, 0.0036580483
        %v2450 = vmul.f32 %v2445, %v2449
        %v2451 = vadd.f32 %v2450, 0.05243302
        %v2452 = vmul.f32 %v2445, %v2451
        %v2453 = vadd.f32 %v2452, 0.18741608
        %v2454 = vmul.f32 %v2445, %v2453
        %v2455 = vadd.f32 %v2454, 1.1283791
        %v2456 = vmul.f32 %v2323, %v2455
        %v2457 = vmul.f32 %v2445, 3.8918573e-05
        %v2458 = vadd.f32 %v2457, 0.001143296
        %v2459 = vmul.f32 %v2445, %v2458
        %v2460 = vadd.f32 %v2459, 0.014752088
        %v2461 = vmul.f32 %v2445, %v2460
        %v2462 = vadd.f32 %v2461, 0.112945676
        %v2463 = vmul.f32 %v2445, %v2462
        %v2464 = vadd.f32 %v2463, 0.4994258
        %v2465 = vmul.f32 %v2445, %v2464
        %v2466 = vadd.f32 %v2465, 1.0
        %v2467 = vrcp.pop %v2466
        %v2468 = vmul.f32 %v2466, %v2467
        %v2469 = vsub.f32 1.0, %v2468
        %v2470 = vmul.f32 %v2467, %v2469
        %v2471 = vadd.f32 %v2467, %v2470
        %vm2472 = vweird.f32 %v2466
        %vm2473 = vweird.f32 %v2467
        %vm2474 = vmor %vm2472, %vm2473
        %v2475 = vsel %vm2474, %v2467, %v2471
        %v2476 = vand.u32 2147483647, %v2466
        %vm2477 = vcmp.eq.f32.partialorder %v2476, 8.507059e+37
        %v2478 = vand.u32 %v2466, 2147483648
        %v2479 = vor.u32 1.1754944e-38, %v2478
        %v2480 = vsel %vm2477, %v2479, %v2475
        %v2481 = vmul.f32 %v2456, %v2480
        %v2482 = vmin.f32 %v2481, 1.0
        %v2483 = vmax.f32 %v2482, -1.0
        %v2484 = vadd.f32 %v2363, 1.0
        %v2485 = vadd.f32 %v2403, 1.0
        %v2486 = vadd.f32 %v2443, 1.0
        %v2487 = vadd.f32 %v2483, 1.0
        %v2488 = vmul.f32 %v2316, %v2484
        %v2489 = vmul.f32 %v2317, %v2485
        %v2490 = vmul.f32 %v2318, %v2486
        %v2491 = vmul.f32 %v2319, %v2487
        %v2492 = vld [vmem:[%s4] sm:$0xff]
        %v2493 = vld [vmem:[%s4 + $0x8] sm:$0xff]
        %v2494 = vld [vmem:[%s4 + $0x10] sm:$0xff]
        %v2495 = vld [vmem:[%s4 + $0x18] sm:$0xff]
        %v2496 = vld [vmem:[%s4 + $0x20] sm:$0xff]
        %v2497 = vld [vmem:[%s4 + $0x28] sm:$0xff]
        %v2498 = vld [vmem:[%s4 + $0x30] sm:$0xff]
        %v2499 = vld [vmem:[%s4 + $0x38] sm:$0xff]
        %v2500 = vld [vmem:[%s4 + $0x40] sm:$0xff]
        %v2501 = vld [vmem:[%s4 + $0x48] sm:$0xff]
        %v2502 = vld [vmem:[%s4 + $0x50] sm:$0xff]
        %v2503 = vld [vmem:[%s4 + $0x58] sm:$0xff]
        %v2504 = vld [vmem:[%s4 + $0x60] sm:$0xff]
        %v2505 = vld [vmem:[%s4 + $0x68] sm:$0xff]
        %v2506 = vld [vmem:[%s4 + $0x70] sm:$0xff]
        %v2507 = vld [vmem:[%s4 + $0x78] sm:$0xff]
        %vm2508 = vcmask 261120
        %v2510 = vsel %vm2508, %v2489, 0
        %2512 = vmatpush.msra.mxu0 0.0
        %2513 = vmatpush.msra.mxu0 0.0
        %2514 = vmatpush.msra.mxu0 0.0
        %2515 = vmatpush.msra.mxu0 0.0
        %2516 = vmatpush.msra.mxu0 0.0
        %2517 = vmatpush.msra.mxu0 0.0
        %2518 = vmatpush.msra.mxu0 0.0
        %2519 = vmatpush.msra.mxu0 0.0
        %2520 = vmatpush.msra.mxu0 0.0
        %2521 = vmatpush.msra.mxu0 0.0
        %2522 = vmatpush.msra.mxu0 0.0
        %2523 = vmatpush.msra.mxu0 0.0
        %2524 = vmatpush.msra.mxu0 %v2499
        %2525 = vmatpush.msra.mxu0 %v2498
        %2526 = vmatpush.msra.mxu0 %v2497
        %2527 = vmatpush.msra.mxu0 %v2496
        %2528 = vmatmul.f32.gmra.mxu0 %v2510
        %v2529 = vpop.f32.mrf.mxu0
        %v2530 = vadd.f32 0.0, %v2529
        %2531 = vdwg.mxu0
        %v2533 = vsel %vm2508, %v2488, 0
        %2535 = vmatpush.msra.mxu0 0.0
        %2536 = vmatpush.msra.mxu0 0.0
        %2537 = vmatpush.msra.mxu0 0.0
        %2538 = vmatpush.msra.mxu0 0.0
        %2539 = vmatpush.msra.mxu0 0.0
        %2540 = vmatpush.msra.mxu0 0.0
        %2541 = vmatpush.msra.mxu0 0.0
        %2542 = vmatpush.msra.mxu0 0.0
        %2543 = vmatpush.msra.mxu0 0.0
        %2544 = vmatpush.msra.mxu0 0.0
        %2545 = vmatpush.msra.mxu0 0.0
        %2546 = vmatpush.msra.mxu0 0.0
        %2547 = vmatpush.msra.mxu0 %v2495
        %2548 = vmatpush.msra.mxu0 %v2494
        %2549 = vmatpush.msra.mxu0 %v2493
        %2550 = vmatpush.msra.mxu0 %v2492
        %2551 = vmatmul.f32.gmra.mxu0 %v2533
        %v2552 = vpop.f32.mrf.mxu0
        %v2553 = vadd.f32 %v2530, %v2552
        %2554 = vdwg.mxu0
        %v2556 = vsel %vm2508, %v2490, 0
        %2558 = vmatpush.msra.mxu0 0.0
        %2559 = vmatpush.msra.mxu0 0.0
        %2560 = vmatpush.msra.mxu0 0.0
        %2561 = vmatpush.msra.mxu0 0.0
        %2562 = vmatpush.msra.mxu0 0.0
        %2563 = vmatpush.msra.mxu0 0.0
        %2564 = vmatpush.msra.mxu0 0.0
        %2565 = vmatpush.msra.mxu0 0.0
        %2566 = vmatpush.msra.mxu0 0.0
        %2567 = vmatpush.msra.mxu0 0.0
        %2568 = vmatpush.msra.mxu0 0.0
        %2569 = vmatpush.msra.mxu0 0.0
        %2570 = vmatpush.msra.mxu0 %v2503
        %2571 = vmatpush.msra.mxu0 %v2502
        %2572 = vmatpush.msra.mxu0 %v2501
        %2573 = vmatpush.msra.mxu0 %v2500
        %2574 = vmatmul.f32.gmra.mxu0 %v2556
        %v2575 = vpop.f32.mrf.mxu0
        %v2576 = vadd.f32 0.0, %v2575
        %2577 = vdwg.mxu0
        %v2578 = vadd.f32 %v2553, %v2576
        %v2580 = vsel %vm2508, %v2491, 0
        %2582 = vmatpush.msra.mxu0 0.0
        %2583 = vmatpush.msra.mxu0 0.0
        %2584 = vmatpush.msra.mxu0 0.0
        %2585 = vmatpush.msra.mxu0 0.0
        %2586 = vmatpush.msra.mxu0 0.0
        %2587 = vmatpush.msra.mxu0 0.0
        %2588 = vmatpush.msra.mxu0 0.0
        %2589 = vmatpush.msra.mxu0 0.0
        %2590 = vmatpush.msra.mxu0 0.0
        %2591 = vmatpush.msra.mxu0 0.0
        %2592 = vmatpush.msra.mxu0 0.0
        %2593 = vmatpush.msra.mxu0 0.0
        %2594 = vmatpush.msra.mxu0 %v2507
        %2595 = vmatpush.msra.mxu0 %v2506
        %2596 = vmatpush.msra.mxu0 %v2505
        %2597 = vmatpush.msra.mxu0 %v2504
        %2598 = vmatmul.f32.gmra.mxu0 %v2580
        %v2599 = vpop.f32.mrf.mxu0
        %v2600 = vadd.f32 0.0, %v2599
        %2601 = vdwg.mxu0
        %v2602 = vadd.f32 %v2578, %v2600
        %v2603 = vld [vmem:[%s8] sm:$0x1]
        %v2605 = vperm.slane %v2603, 0
        %v2607 = vadd.f32 %v2602, %v2605
        %vm2608 = vcmask 130048
        %2609 = vst.msk [vmem:[%s489] sm:$0xff] %vm2608, %v2607
        %s2610 = sand.u32 %s225, 1
        %s2611 = scalar_lea.sflag [#allocation4], %s2610
        %s2612 = sand.u32 %s225, 1
        %s2613 = smul.addr %s2612, 8
        %s2614 = scalar_lea.vmem [#allocation3], %s2613
        // Predicated region
        $region95: #{encoder_forward.1} parent=89 // pred_check
          %p2615 = pneg %p235
        $region96: #{encoder_forward.1} parent=89 // pred_check_branch
          %2617 = sbr.rel (%p2615) target = $region98
        $region97: #{encoder_forward.1} parent=89 // pred_region
          %2619 = vsyncadd %s2611, 0
          %s2620 = smul.addr %s23, 8
          %s2621 = scalar_lea.hbm %s9, %s2620
          %s2623 = sshll.u32 %s2614, 4
          %s2624 = int_to_ptr.vmem [resolvable:$true] %s2623
          %s2625 = sshll.u32 %s2621, 4
          %s2626 = int_to_ptr.hbm [resolvable:$true] %s2625
          %2628 = dma.vmem_to_hbm [thread:$0]  %s2624, 128, %s2626, %s2611
        $region98: #{encoder_forward.1} parent=89 // pred_fallthru
          _
      $region90: #{encoder_forward.1} parent=5 // pred_fallthru
        _
      %p2629 = scmp.le.s32.totalorder 2, %s18
      // Predicated region
      $region99: #{encoder_forward.1} parent=5 // pred_check
        %p2630 = pneg %p2629
      $region100: #{encoder_forward.1} parent=5 // pred_check_branch
        %2632 = sbr.rel (%p2630) target = $region102
      $region101: #{encoder_forward.1} parent=5 // pred_region
        %s2633 = ssub.s32 %s18, 2
        // Predicated region
        $region103: #{encoder_forward.1} parent=101 // pred_check
          %p2634 = pneg %p241
        $region104: #{encoder_forward.1} parent=101 // pred_check_branch
          %2636 = sbr.rel (%p2634) target = $region106
        $region105: #{encoder_forward.1} parent=101 // pred_region
          %s2637 = sand.u32 %s226, 1
          %s2638 = scalar_lea.sflag [#allocation4], %s2637
          %s2639 = sand.u32 %s226, 1
          %s2640 = smul.addr %s2639, 8
          %s2641 = scalar_lea.vmem [#allocation3], %s2640
          %2643 = dma.done %s2638, 128
        $region106: #{encoder_forward.1} parent=101 // pred_fallthru
          _
      $region102: #{encoder_forward.1} parent=5 // pred_fallthru
        _
    $region6: #{encoder_forward.1} parent=1 // loop_footer
      %s22 = sadd.s32 1, %s18
    $region7: #{encoder_forward.1} parent=1 // loop_footer_branch
      %17 = sbr.rel target = $region3
    $region8: #{encoder_forward.1} parent=1 // loop_exit
      _
    %2644 = vsyncpa [#allocation4], 1
    %s2645 = scalar_lea.sflag [#allocation4], 1
    %2646 = vsyncpa %s2645, 1

</llo_original>
